<compile_context>
chip_gen: v5e
topology: v5e:2x2
jax: 0.10.0
libtpu: 0.0.40
codegen_flags: <defaults>
</compile_context>

<pallas_src>
import functools

import jax
import jax.numpy as jnp
from jax.experimental import pallas as pl
from jax.experimental.pallas import tpu as pltpu

LANE = 128
MAX_EDGE_TILE = 1024   # row tile for edge-space matmuls / aggregation edge axis
MAX_NODE_TILE = 256    # row tile for node-space aggregation (keeps tn*te selector small)
VMEM_LIMIT = 32 * 1024 * 1024   # fits v7x's smaller scoped VMEM as well


# ----------------------------- small helpers --------------------------------

def _round_up(x, m):
    return ((x + m - 1) // m) * m


def _pick_edge_tile(e):
    # dst block in agg_apply is (1, te): te must be a multiple of 128 lanes or
    # equal the (padded) edge count.  Aim for >=2 tiles when e is large enough.
    if e < 2 * LANE:
        return max(_round_up(e, 8), 8)
    half = -(-e // 2)
    return min(MAX_EDGE_TILE, _round_up(half, LANE))


def _pick_node_tile(n):
    # >=2 node tiles whenever possible so v7x's two TensorCores both get work.
    if n < 16:
        return max(_round_up(n, 8), 8)
    half = -(-n // 2)
    return min(MAX_NODE_TILE, _round_up(half, 8))


def _pad_rows(x, rows):
    if x.shape[0] == rows:
        return x
    return jnp.pad(x, ((0, rows - x.shape[0]), (0, 0)))


# ----------------------------- Pallas kernels -------------------------------

def _dual_linear_kernel(a_ref, b_ref, wa_ref, wb_ref, bias_ref, o_ref, *, relu):
    """o = [a || b] @ [wa ; wb] + bias   (concat eliminated via weight split)."""
    # TODO(synk): on v6e/v7x stack [a || b] into a single K=256 MXU push when Ka=Kb=128.
    acc = jnp.dot(a_ref[...].astype(jnp.bfloat16), wa_ref[...],
                  preferred_element_type=jnp.float32)
    acc = acc + jnp.dot(b_ref[...].astype(jnp.bfloat16), wb_ref[...],
                        preferred_element_type=jnp.float32)
    acc = acc + bias_ref[...]
    if relu:
        acc = jnp.maximum(acc, 0.0)
    o_ref[...] = acc.astype(o_ref.dtype)


def dual_linear(a, b, wa, wb, bias, *, relu, out_dtype, tile_m):
    """Row-tiled fused linear over two operands: (a @ wa + b @ wb + bias)[relu]."""
    M, Ka = a.shape
    Mb, Kb = b.shape
    assert M == Mb and M % tile_m == 0
    N = wa.shape[1]
    return pl.pallas_call(
        functools.partial(_dual_linear_kernel, relu=relu),
        out_shape=jax.ShapeDtypeStruct((M, N), out_dtype),
        grid=(M // tile_m,),
        in_specs=[
            pl.BlockSpec((tile_m, Ka), lambda i: (i, 0)),
            pl.BlockSpec((tile_m, Kb), lambda i: (i, 0)),
            pl.BlockSpec((Ka, N), lambda i: (0, 0)),   # weights stay VMEM-resident
            pl.BlockSpec((Kb, N), lambda i: (0, 0)),
            pl.BlockSpec((1, N), lambda i: (0, 0)),
        ],
        out_specs=pl.BlockSpec((tile_m, N), lambda i: (i, 0)),
        compiler_params=pltpu.CompilerParams(
            dimension_semantics=("parallel",),
            vmem_limit_bytes=VMEM_LIMIT),
    )(a, b, wa, wb, bias)


def _agg_apply_kernel(lo_ref, hi_ref, dst_ref, m_ref, hself_ref, wself_ref,
                      wneigh_ref, bias_ref, o_ref, acc_ref, deg_ref):
    """Fused CSR mean-aggregation + apply-linear + ReLU.

    Grid = (node tiles, edge tiles).  Edges are sorted by dst; lo/hi (scalar
    prefetch) give the edge-tile range whose dst falls inside the current node
    tile, so only those tiles are DMA'd / processed.  A bf16 one-hot selector
    built in VMEM is pushed through the MXU to accumulate sum_{dst(e)=v} m_e
    and the in-degree in f32 scratch.  On the last step the mean + apply
    linear + ReLU are computed — h_neigh never leaves VMEM.
    """
    ni = pl.program_id(0)
    ei = pl.program_id(1)
    tn = acc_ref.shape[0]
    te = m_ref.shape[0]

    @pl.when(ei == 0)
    def _init():
        acc_ref[...] = jnp.zeros_like(acc_ref)
        deg_ref[...] = jnp.zeros_like(deg_ref)

    lo = lo_ref[ni]
    hi = hi_ref[ni]

    @pl.when(ei <= hi - lo)           # skip edge tiles outside this node tile's range
    def _accumulate():
        node_ids = ni * tn + jax.lax.broadcasted_iota(jnp.int32, (tn, te), 0)
        match = node_ids == dst_ref[...]          # padded edges carry dst = Np -> no match
        onehot = match.astype(jnp.bfloat16)       # selector built directly in bf16
        acc_ref[...] += jnp.dot(onehot, m_ref[...],
                                preferred_element_type=jnp.float32)
        deg_ref[...] += jnp.sum(match.astype(jnp.float32), axis=-1, keepdims=True)

    @pl.when(ei == pl.num_programs(1) - 1)
    def _finalize():
        # DGL fn.mean: nodes with no incoming edges get zeros.
        h_neigh = acc_ref[...] / jnp.maximum(deg_ref[...], 1.0)
        # TODO(synk): on v6e/v7x stack [h_self || h_neigh] @ [w_self ; w_neigh]
        # into a single K=256 MXU push.
        y = jnp.dot(hself_ref[...].astype(jnp.bfloat16), wself_ref[...],
                    preferred_element_type=jnp.float32)
        y = y + jnp.dot(h_neigh.astype(jnp.bfloat16), wneigh_ref[...],
                        preferred_element_type=jnp.float32)
        y = jnp.maximum(y + bias_ref[...], 0.0)   # activation = relu
        o_ref[...] = y.astype(o_ref.dtype)


def agg_apply(lo_tile, hi_tile, dst_row, m, h_self, w_self, w_neigh, bias,
              *, tn, te, out_dtype):
    Np, Fs = h_self.shape
    Ep, H = m.shape
    assert Np % tn == 0 and Ep % te == 0
    Ho = w_self.shape[1]

    def _edge_block(ni, ei, lo_ref, hi_ref):
        # Clamp to [lo, hi]: out-of-range steps keep the same block index so
        # Pallas does not re-DMA the tile; pl.when skips their compute.
        lo = lo_ref[ni]
        hi = jnp.maximum(hi_ref[ni], lo)
        return jnp.minimum(lo + ei, hi)

    # TODO(synk): if DMA is exposed on the edge axis, add pipeline_mode=pl.Buffered(3)
    # on the dst/m BlockSpecs.
    return pl.pallas_call(
        _agg_apply_kernel,
        out_shape=jax.ShapeDtypeStruct((Np, Ho), out_dtype),
        grid_spec=pltpu.PrefetchScalarGridSpec(
            num_scalar_prefetch=2,
            grid=(Np // tn, Ep // te),            # reduction (edge) axis last
            in_specs=[
                pl.BlockSpec((1, te), lambda ni, ei, lo, hi: (0, _edge_block(ni, ei, lo, hi))),
                pl.BlockSpec((te, H), lambda ni, ei, lo, hi: (_edge_block(ni, ei, lo, hi), 0)),
                pl.BlockSpec((tn, Fs), lambda ni, ei, lo, hi: (ni, 0)),
                pl.BlockSpec((Fs, Ho), lambda ni, ei, lo, hi: (0, 0)),
                pl.BlockSpec((H, Ho), lambda ni, ei, lo, hi: (0, 0)),
                pl.BlockSpec((1, Ho), lambda ni, ei, lo, hi: (0, 0)),
            ],
            out_specs=pl.BlockSpec((tn, Ho), lambda ni, ei, lo, hi: (ni, 0)),
            scratch_shapes=[pltpu.VMEM((tn, H), jnp.float32),
                            pltpu.VMEM((tn, 1), jnp.float32)]),
        compiler_params=pltpu.CompilerParams(
            dimension_semantics=("parallel", "arbitrary"),
            vmem_limit_bytes=VMEM_LIMIT),
    )(lo_tile, hi_tile, dst_row, m, h_self, w_self, w_neigh, bias)


# ----------------------------- parameters -----------------------------------

def init_linear(key, fan_in, fan_out):
    """nn.Linear-style init. Returns (W^T:(in,out), b:(1,out)) in f32."""
    kw, kb = jax.random.split(key)
    bound = 1.0 / jnp.sqrt(jnp.float32(fan_in))
    w = jax.random.uniform(kw, (fan_in, fan_out), jnp.float32, -bound, bound)
    b = jax.random.uniform(kb, (1, fan_out), jnp.float32, -bound, bound)
    return w, b


def _pad_w(w, in_pad, out_pad):
    # zero-padding keeps the math exact; bf16 for MXU inputs (f32 accumulation)
    w = jnp.pad(w, ((0, in_pad - w.shape[0]), (0, out_pad - w.shape[1])))
    return w.astype(jnp.bfloat16)


def _pad_b(b, out_pad):
    return jnp.pad(b, ((0, 0), (0, out_pad - b.shape[1])))


def make_params(key, ndim_in, edim, hidden, ndim_out, n_classes):
    k1, k2, k3, k4, k5 = jax.random.split(key, 5)
    out2 = _round_up(ndim_out, LANE)     # 32  -> 128 lanes
    cls = _round_up(n_classes, LANE)     # 10  -> 128 lanes

    w_msg1, b_msg1 = init_linear(k1, ndim_in + edim, hidden)
    w_app1, b_app1 = init_linear(k2, ndim_in + hidden, hidden)
    w_msg2, b_msg2 = init_linear(k3, hidden + edim, ndim_out)
    w_app2, b_app2 = init_linear(k4, hidden + ndim_out, ndim_out)
    w_pred, b_pred = init_linear(k5, 2 * ndim_out, n_classes)

    params = {
        "layer1": dict(
            w_msg_node=_pad_w(w_msg1[:ndim_in], ndim_in, hidden),
            w_msg_edge=_pad_w(w_msg1[ndim_in:], edim, hidden),
            b_msg=_pad_b(b_msg1, hidden),
            w_apply_self=_pad_w(w_app1[:ndim_in], ndim_in, hidden),
            w_apply_neigh=_pad_w(w_app1[ndim_in:], hidden, hidden),
            b_apply=_pad_b(b_app1, hidden),
        ),
        "layer2": dict(
            w_msg_node=_pad_w(w_msg2[:hidden], hidden, out2),
            w_msg_edge=_pad_w(w_msg2[hidden:], edim, out2),
            b_msg=_pad_b(b_msg2, out2),
            w_apply_self=_pad_w(w_app2[:hidden], hidden, out2),
            w_apply_neigh=_pad_w(w_app2[hidden:], out2, out2),
            b_apply=_pad_b(b_app2, out2),
        ),
        "pred": dict(
            w_src=_pad_w(w_pred[:ndim_out], out2, cls),
            w_dst=_pad_w(w_pred[ndim_out:], out2, cls),
            b=_pad_b(b_pred, cls),
        ),
    }
    raw = {  # unsplit f32 weights, for the pure-JAX reference check
        "layer1": (w_msg1, b_msg1, w_app1, b_app1),
        "layer2": (w_msg2, b_msg2, w_app2, b_app2),
        "pred": (w_pred, b_pred),
    }
    return params, raw


# ----------------------------- model forward --------------------------------

@functools.partial(jax.jit, static_argnames=("num_nodes", "n_classes"))
def model_forward(params, nfeats, efeats, src, dst, *, num_nodes, n_classes):
    N, E = num_nodes, efeats.shape[0]
    tn = _pick_node_tile(N)
    te = _pick_edge_tile(E)
    Np, Ep = _round_up(N, tn), _round_up(E, te)
    n_node_tiles = Np // tn

    # Pre-cast streaming inputs to bf16 (halves input DMA; f32 accumulation in-kernel).
    nfeats_p = _pad_rows(nfeats, Np).astype(jnp.bfloat16)
    efeats_p = _pad_rows(efeats, Ep).astype(jnp.bfloat16)

    src32 = src.astype(jnp.int32)
    dst32 = dst.astype(jnp.int32)

    # --- CSR-style bucketing of edges by destination (wrapper-side) ----------
    # Padded edges get dst = Np so they sort last, fall outside every node-tile
    # range, and never match a node row inside the kernel.
    dst_key = jnp.pad(dst32, (0, Ep - E), constant_values=Np)
    order = jnp.argsort(dst_key)
    dst_sorted = dst_key[order]
    src_sorted = jnp.pad(src32, (0, Ep - E))[order]
    ef_sorted = efeats_p[order]

    tile_starts = jnp.arange(n_node_tiles, dtype=jnp.int32) * tn
    e_start = jnp.searchsorted(dst_sorted, tile_starts, side="left").astype(jnp.int32)
    e_end = jnp.searchsorted(dst_sorted, tile_starts + tn, side="left").astype(jnp.int32)
    lo_tile = (e_start // te).astype(jnp.int32)
    hi_tile = jnp.where(e_end > e_start, (e_end - 1) // te, lo_tile - 1).astype(jnp.int32)
    dst_sorted_row = dst_sorted.reshape(1, Ep)

    # Original-order indices for the edge-score predictor.
    src_p = jnp.pad(src32, (0, Ep - E))
    dst_p = jnp.pad(dst32, (0, Ep - E))

    def sage_layer(p, h):
        # TODO(synk): gather h[src_sorted] inside the message kernel (VMEM-resident h
        # + scalar-prefetched indices) instead of materializing the XLA gather in HBM.
        m = dual_linear(h[src_sorted], ef_sorted, p["w_msg_node"], p["w_msg_edge"],
                        p["b_msg"], relu=False, out_dtype=jnp.bfloat16, tile_m=te)
        return agg_apply(lo_tile, hi_tile, dst_sorted_row, m, h,
                         p["w_apply_self"], p["w_apply_neigh"], p["b_apply"],
                         tn=tn, te=te, out_dtype=jnp.bfloat16)

    h = sage_layer(params["layer1"], nfeats_p)
    # nn.Dropout between layers: inference semantics (identity).
    h = sage_layer(params["layer2"], h)
    # h.sum(1) in the reference collapses the singleton middle dim (already squeezed).

    # TODO(synk): fuse the h[src]/h[dst] gathers into the predictor kernel
    # (keep h VMEM-resident) to drop two HBM round-trips for large E.
    scores = dual_linear(h[src_p], h[dst_p],
                         params["pred"]["w_src"], params["pred"]["w_dst"],
                         params["pred"]["b"],
                         relu=False, out_dtype=jnp.float32, tile_m=te)
    return scores[:E, :n_classes]


def reference_forward(raw, nfeats, efeats, src, dst, num_nodes):
    """Pure-JAX f32 reference (same semantics as the PyTorch module)."""
    def layer(w_msg, b_msg, w_app, b_app, h):
        m = jnp.concatenate([h[src], efeats], axis=-1) @ w_msg + b_msg
        sums = jnp.zeros((num_nodes, m.shape[1]), jnp.float32).at[dst].add(m)
        deg = jnp.zeros((num_nodes, 1), jnp.float32).at[dst].add(1.0)
        h_neigh = sums / jnp.maximum(deg, 1.0)
        return jnp.maximum(jnp.concatenate([h, h_neigh], axis=-1) @ w_app + b_app, 0.0)

    h = layer(*raw["layer1"], nfeats)
    h = layer(*raw["layer2"], h)
    w_pred, b_pred = raw["pred"]
    return jnp.concatenate([h[src], h[dst]], axis=-1) @ w_pred + b_pred


# ----------------------------- main ------------------------------------------

if __name__ == "__main__":
    N, E = 8, 16                  # nodes, edges
    ndim_in, edim = 16, 16        # input node / edge feature dims
    hidden, ndim_out = 128, 32    # SAGE hidden (fixed 128 in reference), output dim
    n_classes = 10                # bin=False -> 10 classes

    key = jax.random.PRNGKey(0)
    k_nf, k_ef, k_src, k_dst, k_par = jax.random.split(key, 5)

    # Reference forward takes (N,1,ndim_in)/(E,1,edim); squeeze the singleton dim.
    nfeats = jax.random.normal(k_nf, (N, 1, ndim_in), jnp.float32)
    efeats = jax.random.normal(k_ef, (E, 1, edim), jnp.float32)
    src = jax.random.randint(k_src, (E,), 0, N)
    dst = jax.random.randint(k_dst, (E,), 0, N)

    params, raw = make_params(k_par, ndim_in, edim, hidden, ndim_out, n_classes)

    scores = model_forward(params, nfeats[:, 0, :], efeats[:, 0, :], src, dst,
                           num_nodes=N, n_classes=n_classes)
    jax.block_until_ready(scores)

    assert scores.shape == (E, n_classes)
    assert scores.dtype == jnp.float32

    ref = reference_forward(raw, nfeats[:, 0, :], efeats[:, 0, :], src, dst, N)
    assert bool(jnp.allclose(scores, ref, atol=1e-1, rtol=1e-1)), \
        "Pallas output diverged from pure-JAX reference"

    print("KERNEL_OK")
</pallas_src>

<mosaic_0001>
module attributes {stable_mosaic.version = 11 : i64} {
  func.func @_dual_linear_kernel(%arg0: i32, %arg1: memref<16x16xbf16, #tpu.memory_space<vmem>>, %arg2: memref<16x16xbf16, #tpu.memory_space<vmem>>, %arg3: memref<16x128xbf16, #tpu.memory_space<vmem>>, %arg4: memref<16x128xbf16, #tpu.memory_space<vmem>>, %arg5: memref<1x128xf32, #tpu.memory_space<vmem>>, %arg6: memref<16x128xbf16, #tpu.memory_space<vmem>>) attributes {dimension_semantics = [#tpu.dimension_semantics<parallel>], iteration_bounds = array<i64: 1>, scalar_prefetch = 0 : i64, scratch_operands = 0 : i64, tpu.core_type = #tpu.core_type<tc>, window_params = [{transform_indices = @transform_0, window_bounds = array<i64: 16, 16>}, {transform_indices = @transform_1, window_bounds = array<i64: 16, 16>}, {pipeline_mode = #tpu.pipeline_mode<synchronous>, transform_indices = @transform_2, window_bounds = array<i64: 16, 128>}, {pipeline_mode = #tpu.pipeline_mode<synchronous>, transform_indices = @transform_3, window_bounds = array<i64: 16, 128>}, {pipeline_mode = #tpu.pipeline_mode<synchronous>, transform_indices = @transform_4, window_bounds = array<i64: 1, 128>}, {transform_indices = @transform_5, window_bounds = array<i64: 16, 128>}]} {
    %c0 = arith.constant 0 : index
    %c0_0 = arith.constant 0 : index
    %0 = vector.load %arg1[%c0, %c0_0] : memref<16x16xbf16, #tpu.memory_space<vmem>>, vector<16x16xbf16>
    %c0_1 = arith.constant 0 : index
    %c0_2 = arith.constant 0 : index
    %1 = vector.load %arg3[%c0_1, %c0_2] : memref<16x128xbf16, #tpu.memory_space<vmem>>, vector<16x128xbf16>
    %cst = arith.constant dense<0.000000e+00> : vector<16x128xf32>
    %2 = tpu.matmul %0, %1, %cst {dimension_numbers = #tpu.dot_dimension_numbers<[1], [0], [0], [1], [0, 0, 1, 1], [], []>} : vector<16x16xbf16>, vector<16x128xbf16>, vector<16x128xf32> -> vector<16x128xf32>
    %c0_3 = arith.constant 0 : index
    %c0_4 = arith.constant 0 : index
    %3 = vector.load %arg2[%c0_3, %c0_4] : memref<16x16xbf16, #tpu.memory_space<vmem>>, vector<16x16xbf16>
    %c0_5 = arith.constant 0 : index
    %c0_6 = arith.constant 0 : index
    %4 = vector.load %arg4[%c0_5, %c0_6] : memref<16x128xbf16, #tpu.memory_space<vmem>>, vector<16x128xbf16>
    %cst_7 = arith.constant dense<0.000000e+00> : vector<16x128xf32>
    %5 = tpu.matmul %3, %4, %cst_7 {dimension_numbers = #tpu.dot_dimension_numbers<[1], [0], [0], [1], [0, 0, 1, 1], [], []>} : vector<16x16xbf16>, vector<16x128xbf16>, vector<16x128xf32> -> vector<16x128xf32>
    %6 = arith.addf %2, %5 : vector<16x128xf32>
    %c0_8 = arith.constant 0 : index
    %c0_9 = arith.constant 0 : index
    %7 = vector.load %arg5[%c0_8, %c0_9] : memref<1x128xf32, #tpu.memory_space<vmem>>, vector<1x128xf32>
    %8 = vector.broadcast %7 : vector<1x128xf32> to vector<16x128xf32>
    %9 = arith.addf %6, %8 : vector<16x128xf32>
    %10 = arith.truncf %9 : vector<16x128xf32> to vector<16x128xbf16>
    %c0_10 = arith.constant 0 : index
    %c0_11 = arith.constant 0 : index
    %11 = vector.load %arg6[%c0_10, %c0_11] : memref<16x128xbf16, #tpu.memory_space<vmem>>, vector<16x128xbf16>
    tpu.vector_store %arg6[%c0_10, %c0_11], %10 {strides = array<i32>} : memref<16x128xbf16, #tpu.memory_space<vmem>>, vector<16x128xbf16>,
    return
  }
  func.func @transform_0(%arg0: i32) -> (i32, i32) {
    %c0_i32 = arith.constant 0 : i32
    %c0_i32_0 = arith.constant 0 : i32
    return %arg0, %c0_i32 : i32, i32
  }
  func.func @transform_1(%arg0: i32) -> (i32, i32) {
    %c0_i32 = arith.constant 0 : i32
    %c0_i32_0 = arith.constant 0 : i32
    return %arg0, %c0_i32 : i32, i32
  }
  func.func @transform_2(%arg0: i32) -> (i32, i32) {
    %c0_i32 = arith.constant 0 : i32
    %c0_i32_0 = arith.constant 0 : i32
    %c0_i32_1 = arith.constant 0 : i32
    return %c0_i32, %c0_i32_0 : i32, i32
  }
  func.func @transform_3(%arg0: i32) -> (i32, i32) {
    %c0_i32 = arith.constant 0 : i32
    %c0_i32_0 = arith.constant 0 : i32
    %c0_i32_1 = arith.constant 0 : i32
    return %c0_i32, %c0_i32_0 : i32, i32
  }
  func.func @transform_4(%arg0: i32) -> (i32, i32) {
    %c0_i32 = arith.constant 0 : i32
    %c0_i32_0 = arith.constant 0 : i32
    %c0_i32_1 = arith.constant 0 : i32
    return %c0_i32, %c0_i32_0 : i32, i32
  }
  func.func @transform_5(%arg0: i32) -> (i32, i32) {
    %c0_i32 = arith.constant 0 : i32
    %c0_i32_0 = arith.constant 0 : i32
    return %arg0, %c0_i32 : i32, i32
  }
}

module attributes {stable_mosaic.version = 11 : i64} {
  func.func @_agg_apply_kernel(%arg0: i32, %arg1: i32, %arg2: memref<1xi32, #tpu.memory_space<smem>>, %arg3: memref<1xi32, #tpu.memory_space<smem>>, %arg4: memref<1x16xi32, #tpu.memory_space<vmem>>, %arg5: memref<16x128xbf16, #tpu.memory_space<vmem>>, %arg6: memref<8x16xbf16, #tpu.memory_space<vmem>>, %arg7: memref<16x128xbf16, #tpu.memory_space<vmem>>, %arg8: memref<128x128xbf16, #tpu.memory_space<vmem>>, %arg9: memref<1x128xf32, #tpu.memory_space<vmem>>, %arg10: memref<8x128xbf16, #tpu.memory_space<vmem>>, %arg11: memref<8x128xf32, #tpu.memory_space<vmem>>, %arg12: memref<8x1xf32, #tpu.memory_space<vmem>>) attributes {dimension_semantics = [#tpu.dimension_semantics<parallel>, #tpu.dimension_semantics<arbitrary>], iteration_bounds = array<i64: 1, 1>, scalar_prefetch = 2 : i64, scratch_operands = 2 : i64, tpu.core_type = #tpu.core_type<tc>, window_params = [{transform_indices = @transform_0, window_bounds = array<i64: 1, 16>}, {transform_indices = @transform_1, window_bounds = array<i64: 16, 128>}, {transform_indices = @transform_2, window_bounds = array<i64: 8, 16>}, {pipeline_mode = #tpu.pipeline_mode<synchronous>, transform_indices = @transform_3, window_bounds = array<i64: 16, 128>}, {pipeline_mode = #tpu.pipeline_mode<synchronous>, transform_indices = @transform_4, window_bounds = array<i64: 128, 128>}, {pipeline_mode = #tpu.pipeline_mode<synchronous>, transform_indices = @transform_5, window_bounds = array<i64: 1, 128>}, {transform_indices = @transform_6, window_bounds = array<i64: 8, 128>}]} {
    %c0_i32 = arith.constant 0 : i32
    %0 = arith.cmpi eq, %arg1, %c0_i32 : i32
    %1 = arith.extui %0 : i1 to i32
    %c0_i32_0 = arith.constant 0 : i32
    %2 = arith.cmpi ne, %1, %c0_i32_0 : i32
    scf.if %2 {
      %cst = arith.constant 0.000000e+00 : f32
      %14 = vector.broadcast %cst : f32 to vector<8x128xf32>
      %c0 = arith.constant 0 : index
      %c0_4 = arith.constant 0 : index
      %15 = vector.load %arg11[%c0, %c0_4] : memref<8x128xf32, #tpu.memory_space<vmem>>, vector<8x128xf32>
      tpu.vector_store %arg11[%c0, %c0_4], %14 {strides = array<i32>} : memref<8x128xf32, #tpu.memory_space<vmem>>, vector<8x128xf32>,
      %cst_5 = arith.constant 0.000000e+00 : f32
      %16 = vector.broadcast %cst_5 : f32 to vector<8x1xf32>
      %c0_6 = arith.constant 0 : index
      %c0_7 = arith.constant 0 : index
      %17 = vector.load %arg12[%c0_6, %c0_7] : memref<8x1xf32, #tpu.memory_space<vmem>>, vector<8x1xf32>
      tpu.vector_store %arg12[%c0_6, %c0_7], %16 {strides = array<i32>} : memref<8x1xf32, #tpu.memory_space<vmem>>, vector<8x1xf32>,
    } else {
    }
    %3 = arith.index_cast %arg0 : i32 to index
    %4 = memref.load %arg2[%3] : memref<1xi32, #tpu.memory_space<smem>>
    %5 = arith.index_cast %arg0 : i32 to index
    %6 = memref.load %arg3[%5] : memref<1xi32, #tpu.memory_space<smem>>
    %7 = arith.subi %6, %4 : i32
    %8 = arith.cmpi sle, %arg1, %7 : i32
    %9 = arith.extui %8 : i1 to i32
    %c0_i32_1 = arith.constant 0 : i32
    %10 = arith.cmpi ne, %9, %c0_i32_1 : i32
    scf.if %10 {
      %c8_i32 = arith.constant 8 : i32
      %14 = arith.muli %arg0, %c8_i32 : i32
      %15 = tpu.iota {dimensions = array<i32: 0>} : vector<8x16xi32>
      %16 = vector.broadcast %14 : i32 to vector<8x16xi32>
      %17 = arith.addi %16, %15 : vector<8x16xi32>
      %c0 = arith.constant 0 : index
      %c0_4 = arith.constant 0 : index
      %18 = vector.load %arg4[%c0, %c0_4] : memref<1x16xi32, #tpu.memory_space<vmem>>, vector<1x16xi32>
      %19 = vector.broadcast %18 : vector<1x16xi32> to vector<8x16xi32>
      %20 = arith.cmpi eq, %17, %19 : vector<8x16xi32>
      %21 = arith.extui %20 : vector<8x16xi1> to vector<8x16xi32>
      %22 = arith.sitofp %21 : vector<8x16xi32> to vector<8x16xf32>
      %23 = arith.truncf %22 : vector<8x16xf32> to vector<8x16xbf16>
      %c0_5 = arith.constant 0 : index
      %c0_6 = arith.constant 0 : index
      %24 = vector.load %arg11[%c0_5, %c0_6] : memref<8x128xf32, #tpu.memory_space<vmem>>, vector<8x128xf32>
      %c0_7 = arith.constant 0 : index
      %c0_8 = arith.constant 0 : index
      %25 = vector.load %arg5[%c0_7, %c0_8] : memref<16x128xbf16, #tpu.memory_space<vmem>>, vector<16x128xbf16>
      %cst = arith.constant dense<0.000000e+00> : vector<8x128xf32>
      %26 = tpu.matmul %23, %25, %cst {dimension_numbers = #tpu.dot_dimension_numbers<[1], [0], [0], [1], [0, 0, 1, 1], [], []>} : vector<8x16xbf16>, vector<16x128xbf16>, vector<8x128xf32> -> vector<8x128xf32>
      %27 = arith.addf %24, %26 : vector<8x128xf32>
      %c0_9 = arith.constant 0 : index
      %c0_10 = arith.constant 0 : index
      %28 = vector.load %arg11[%c0_9, %c0_10] : memref<8x128xf32, #tpu.memory_space<vmem>>, vector<8x128xf32>
      tpu.vector_store %arg11[%c0_9, %c0_10], %27 {strides = array<i32>} : memref<8x128xf32, #tpu.memory_space<vmem>>, vector<8x128xf32>,
      %c0_11 = arith.constant 0 : index
      %c0_12 = arith.constant 0 : index
      %29 = vector.load %arg12[%c0_11, %c0_12] : memref<8x1xf32, #tpu.memory_space<vmem>>, vector<8x1xf32>
      %30 = arith.extui %20 : vector<8x16xi1> to vector<8x16xi32>
      %31 = arith.sitofp %30 : vector<8x16xi32> to vector<8x16xf32>
      %cst_13 = arith.constant dense<0.000000e+00> : vector<8xf32>
      %32 = vector.multi_reduction <add>, %31, %cst_13 [1] : vector<8x16xf32> to vector<8xf32>
      %33 = vector.shape_cast %32 : vector<8xf32> to vector<8x1xf32>
      %34 = arith.addf %29, %33 : vector<8x1xf32>
      %c0_14 = arith.constant 0 : index
      %c0_15 = arith.constant 0 : index
      %35 = vector.load %arg12[%c0_14, %c0_15] : memref<8x1xf32, #tpu.memory_space<vmem>>, vector<8x1xf32>
      tpu.vector_store %arg12[%c0_14, %c0_15], %34 {strides = array<i32>} : memref<8x1xf32, #tpu.memory_space<vmem>>, vector<8x1xf32>,
    } else {
    }
    %c0_i32_2 = arith.constant 0 : i32
    %11 = arith.cmpi eq, %arg1, %c0_i32_2 : i32
    %12 = arith.extui %11 : i1 to i32
    %c0_i32_3 = arith.constant 0 : i32
    %13 = arith.cmpi ne, %12, %c0_i32_3 : i32
    scf.if %13 {
      %c0 = arith.constant 0 : index
      %c0_4 = arith.constant 0 : index
      %14 = vector.load %arg11[%c0, %c0_4] : memref<8x128xf32, #tpu.memory_space<vmem>>, vector<8x128xf32>
      %c0_5 = arith.constant 0 : index
      %c0_6 = arith.constant 0 : index
      %15 = vector.load %arg12[%c0_5, %c0_6] : memref<8x1xf32, #tpu.memory_space<vmem>>, vector<8x1xf32>
      %cst = arith.constant 1.000000e+00 : f32
      %16 = vector.broadcast %cst : f32 to vector<8x1xf32>
      %17 = arith.maximumf %15, %16 : vector<8x1xf32>
      %18 = vector.broadcast %17 : vector<8x1xf32> to vector<8x128xf32>
      %19 = arith.divf %14, %18 : vector<8x128xf32>
      %c0_7 = arith.constant 0 : index
      %c0_8 = arith.constant 0 : index
      %20 = vector.load %arg6[%c0_7, %c0_8] : memref<8x16xbf16, #tpu.memory_space<vmem>>, vector<8x16xbf16>
      %c0_9 = arith.constant 0 : index
      %c0_10 = arith.constant 0 : index
      %21 = vector.load %arg7[%c0_9, %c0_10] : memref<16x128xbf16, #tpu.memory_space<vmem>>, vector<16x128xbf16>
      %cst_11 = arith.constant dense<0.000000e+00> : vector<8x128xf32>
      %22 = tpu.matmul %20, %21, %cst_11 {dimension_numbers = #tpu.dot_dimension_numbers<[1], [0], [0], [1], [0, 0, 1, 1], [], []>} : vector<8x16xbf16>, vector<16x128xbf16>, vector<8x128xf32> -> vector<8x128xf32>
      %23 = arith.truncf %19 : vector<8x128xf32> to vector<8x128xbf16>
      %c0_12 = arith.constant 0 : index
      %c0_13 = arith.constant 0 : index
      %24 = vector.load %arg8[%c0_12, %c0_13] : memref<128x128xbf16, #tpu.memory_space<vmem>>, vector<128x128xbf16>
      %cst_14 = arith.constant dense<0.000000e+00> : vector<8x128xf32>
      %25 = tpu.matmul %23, %24, %cst_14 {dimension_numbers = #tpu.dot_dimension_numbers<[1], [0], [0], [1], [0, 0, 1, 1], [], []>} : vector<8x128xbf16>, vector<128x128xbf16>, vector<8x128xf32> -> vector<8x128xf32>
      %26 = arith.addf %22, %25 : vector<8x128xf32>
      %c0_15 = arith.constant 0 : index
      %c0_16 = arith.constant 0 : index
      %27 = vector.load %arg9[%c0_15, %c0_16] : memref<1x128xf32, #tpu.memory_space<vmem>>, vector<1x128xf32>
      %28 = vector.broadcast %27 : vector<1x128xf32> to vector<8x128xf32>
      %29 = arith.addf %26, %28 : vector<8x128xf32>
      %cst_17 = arith.constant 0.000000e+00 : f32
      %30 = vector.broadcast %cst_17 : f32 to vector<8x128xf32>
      %31 = arith.maximumf %29, %30 : vector<8x128xf32>
      %32 = arith.truncf %31 : vector<8x128xf32> to vector<8x128xbf16>
      %c0_18 = arith.constant 0 : index
      %c0_19 = arith.constant 0 : index
      %33 = vector.load %arg10[%c0_18, %c0_19] : memref<8x128xbf16, #tpu.memory_space<vmem>>, vector<8x128xbf16>
      tpu.vector_store %arg10[%c0_18, %c0_19], %32 {strides = array<i32>} : memref<8x128xbf16, #tpu.memory_space<vmem>>, vector<8x128xbf16>,
    } else {
    }
    return
  }
  func.func @transform_0(%arg0: i32, %arg1: i32, %arg2: memref<1xi32, #tpu.memory_space<smem>>, %arg3: memref<1xi32, #tpu.memory_space<smem>>) -> (i32, i32) {
    %0 = arith.index_cast %arg0 : i32 to index
    %1 = memref.load %arg2[%0] : memref<1xi32, #tpu.memory_space<smem>>
    %2 = arith.index_cast %arg0 : i32 to index
    %3 = memref.load %arg3[%2] : memref<1xi32, #tpu.memory_space<smem>>
    %4 = arith.maxsi %3, %1 : i32
    %5 = arith.addi %1, %arg1 : i32
    %6 = arith.minsi %5, %4 : i32
    %c0_i32 = arith.constant 0 : i32
    %c0_i32_0 = arith.constant 0 : i32
    return %c0_i32, %6 : i32, i32
  }
  func.func @transform_1(%arg0: i32, %arg1: i32, %arg2: memref<1xi32, #tpu.memory_space<smem>>, %arg3: memref<1xi32, #tpu.memory_space<smem>>) -> (i32, i32) {
    %0 = arith.index_cast %arg0 : i32 to index
    %1 = memref.load %arg2[%0] : memref<1xi32, #tpu.memory_space<smem>>
    %2 = arith.index_cast %arg0 : i32 to index
    %3 = memref.load %arg3[%2] : memref<1xi32, #tpu.memory_space<smem>>
    %4 = arith.maxsi %3, %1 : i32
    %5 = arith.addi %1, %arg1 : i32
    %6 = arith.minsi %5, %4 : i32
    %c0_i32 = arith.constant 0 : i32
    %c0_i32_0 = arith.constant 0 : i32
    return %6, %c0_i32 : i32, i32
  }
  func.func @transform_2(%arg0: i32, %arg1: i32, %arg2: memref<1xi32, #tpu.memory_space<smem>>, %arg3: memref<1xi32, #tpu.memory_space<smem>>) -> (i32, i32) {
    %c0_i32 = arith.constant 0 : i32
    %c0_i32_0 = arith.constant 0 : i32
    return %arg0, %c0_i32 : i32, i32
  }
  func.func @transform_3(%arg0: i32, %arg1: i32, %arg2: memref<1xi32, #tpu.memory_space<smem>>, %arg3: memref<1xi32, #tpu.memory_space<smem>>) -> (i32, i32) {
    %c0_i32 = arith.constant 0 : i32
    %c0_i32_0 = arith.constant 0 : i32
    %c0_i32_1 = arith.constant 0 : i32
    return %c0_i32, %c0_i32_0 : i32, i32
  }
  func.func @transform_4(%arg0: i32, %arg1: i32, %arg2: memref<1xi32, #tpu.memory_space<smem>>, %arg3: memref<1xi32, #tpu.memory_space<smem>>) -> (i32, i32) {
    %c0_i32 = arith.constant 0 : i32
    %c0_i32_0 = arith.constant 0 : i32
    %c0_i32_1 = arith.constant 0 : i32
    return %c0_i32, %c0_i32_0 : i32, i32
  }
  func.func @transform_5(%arg0: i32, %arg1: i32, %arg2: memref<1xi32, #tpu.memory_space<smem>>, %arg3: memref<1xi32, #tpu.memory_space<smem>>) -> (i32, i32) {
    %c0_i32 = arith.constant 0 : i32
    %c0_i32_0 = arith.constant 0 : i32
    %c0_i32_1 = arith.constant 0 : i32
    return %c0_i32, %c0_i32_0 : i32, i32
  }
  func.func @transform_6(%arg0: i32, %arg1: i32, %arg2: memref<1xi32, #tpu.memory_space<smem>>, %arg3: memref<1xi32, #tpu.memory_space<smem>>) -> (i32, i32) {
    %c0_i32 = arith.constant 0 : i32
    %c0_i32_0 = arith.constant 0 : i32
    return %arg0, %c0_i32 : i32, i32
  }
}

module attributes {stable_mosaic.version = 11 : i64} {
  func.func @_dual_linear_kernel(%arg0: i32, %arg1: memref<16x128xbf16, #tpu.memory_space<vmem>>, %arg2: memref<16x16xbf16, #tpu.memory_space<vmem>>, %arg3: memref<128x128xbf16, #tpu.memory_space<vmem>>, %arg4: memref<16x128xbf16, #tpu.memory_space<vmem>>, %arg5: memref<1x128xf32, #tpu.memory_space<vmem>>, %arg6: memref<16x128xbf16, #tpu.memory_space<vmem>>) attributes {dimension_semantics = [#tpu.dimension_semantics<parallel>], iteration_bounds = array<i64: 1>, scalar_prefetch = 0 : i64, scratch_operands = 0 : i64, tpu.core_type = #tpu.core_type<tc>, window_params = [{transform_indices = @transform_0, window_bounds = array<i64: 16, 128>}, {transform_indices = @transform_1, window_bounds = array<i64: 16, 16>}, {pipeline_mode = #tpu.pipeline_mode<synchronous>, transform_indices = @transform_2, window_bounds = array<i64: 128, 128>}, {pipeline_mode = #tpu.pipeline_mode<synchronous>, transform_indices = @transform_3, window_bounds = array<i64: 16, 128>}, {pipeline_mode = #tpu.pipeline_mode<synchronous>, transform_indices = @transform_4, window_bounds = array<i64: 1, 128>}, {transform_indices = @transform_5, window_bounds = array<i64: 16, 128>}]} {
    %c0 = arith.constant 0 : index
    %c0_0 = arith.constant 0 : index
    %0 = vector.load %arg1[%c0, %c0_0] : memref<16x128xbf16, #tpu.memory_space<vmem>>, vector<16x128xbf16>
    %c0_1 = arith.constant 0 : index
    %c0_2 = arith.constant 0 : index
    %1 = vector.load %arg3[%c0_1, %c0_2] : memref<128x128xbf16, #tpu.memory_space<vmem>>, vector<128x128xbf16>
    %cst = arith.constant dense<0.000000e+00> : vector<16x128xf32>
    %2 = tpu.matmul %0, %1, %cst {dimension_numbers = #tpu.dot_dimension_numbers<[1], [0], [0], [1], [0, 0, 1, 1], [], []>} : vector<16x128xbf16>, vector<128x128xbf16>, vector<16x128xf32> -> vector<16x128xf32>
    %c0_3 = arith.constant 0 : index
    %c0_4 = arith.constant 0 : index
    %3 = vector.load %arg2[%c0_3, %c0_4] : memref<16x16xbf16, #tpu.memory_space<vmem>>, vector<16x16xbf16>
    %c0_5 = arith.constant 0 : index
    %c0_6 = arith.constant 0 : index
    %4 = vector.load %arg4[%c0_5, %c0_6] : memref<16x128xbf16, #tpu.memory_space<vmem>>, vector<16x128xbf16>
    %cst_7 = arith.constant dense<0.000000e+00> : vector<16x128xf32>
    %5 = tpu.matmul %3, %4, %cst_7 {dimension_numbers = #tpu.dot_dimension_numbers<[1], [0], [0], [1], [0, 0, 1, 1], [], []>} : vector<16x16xbf16>, vector<16x128xbf16>, vector<16x128xf32> -> vector<16x128xf32>
    %6 = arith.addf %2, %5 : vector<16x128xf32>
    %c0_8 = arith.constant 0 : index
    %c0_9 = arith.constant 0 : index
    %7 = vector.load %arg5[%c0_8, %c0_9] : memref<1x128xf32, #tpu.memory_space<vmem>>, vector<1x128xf32>
    %8 = vector.broadcast %7 : vector<1x128xf32> to vector<16x128xf32>
    %9 = arith.addf %6, %8 : vector<16x128xf32>
    %10 = arith.truncf %9 : vector<16x128xf32> to vector<16x128xbf16>
    %c0_10 = arith.constant 0 : index
    %c0_11 = arith.constant 0 : index
    %11 = vector.load %arg6[%c0_10, %c0_11] : memref<16x128xbf16, #tpu.memory_space<vmem>>, vector<16x128xbf16>
    tpu.vector_store %arg6[%c0_10, %c0_11], %10 {strides = array<i32>} : memref<16x128xbf16, #tpu.memory_space<vmem>>, vector<16x128xbf16>,
    return
  }
  func.func @transform_0(%arg0: i32) -> (i32, i32) {
    %c0_i32 = arith.constant 0 : i32
    %c0_i32_0 = arith.constant 0 : i32
    return %arg0, %c0_i32 : i32, i32
  }
  func.func @transform_1(%arg0: i32) -> (i32, i32) {
    %c0_i32 = arith.constant 0 : i32
    %c0_i32_0 = arith.constant 0 : i32
    return %arg0, %c0_i32 : i32, i32
  }
  func.func @transform_2(%arg0: i32) -> (i32, i32) {
    %c0_i32 = arith.constant 0 : i32
    %c0_i32_0 = arith.constant 0 : i32
    %c0_i32_1 = arith.constant 0 : i32
    return %c0_i32, %c0_i32_0 : i32, i32
  }
  func.func @transform_3(%arg0: i32) -> (i32, i32) {
    %c0_i32 = arith.constant 0 : i32
    %c0_i32_0 = arith.constant 0 : i32
    %c0_i32_1 = arith.constant 0 : i32
    return %c0_i32, %c0_i32_0 : i32, i32
  }
  func.func @transform_4(%arg0: i32) -> (i32, i32) {
    %c0_i32 = arith.constant 0 : i32
    %c0_i32_0 = arith.constant 0 : i32
    %c0_i32_1 = arith.constant 0 : i32
    return %c0_i32, %c0_i32_0 : i32, i32
  }
  func.func @transform_5(%arg0: i32) -> (i32, i32) {
    %c0_i32 = arith.constant 0 : i32
    %c0_i32_0 = arith.constant 0 : i32
    return %arg0, %c0_i32 : i32, i32
  }
}

module attributes {stable_mosaic.version = 11 : i64} {
  func.func @_agg_apply_kernel(%arg0: i32, %arg1: i32, %arg2: memref<1xi32, #tpu.memory_space<smem>>, %arg3: memref<1xi32, #tpu.memory_space<smem>>, %arg4: memref<1x16xi32, #tpu.memory_space<vmem>>, %arg5: memref<16x128xbf16, #tpu.memory_space<vmem>>, %arg6: memref<8x128xbf16, #tpu.memory_space<vmem>>, %arg7: memref<128x128xbf16, #tpu.memory_space<vmem>>, %arg8: memref<128x128xbf16, #tpu.memory_space<vmem>>, %arg9: memref<1x128xf32, #tpu.memory_space<vmem>>, %arg10: memref<8x128xbf16, #tpu.memory_space<vmem>>, %arg11: memref<8x128xf32, #tpu.memory_space<vmem>>, %arg12: memref<8x1xf32, #tpu.memory_space<vmem>>) attributes {dimension_semantics = [#tpu.dimension_semantics<parallel>, #tpu.dimension_semantics<arbitrary>], iteration_bounds = array<i64: 1, 1>, scalar_prefetch = 2 : i64, scratch_operands = 2 : i64, tpu.core_type = #tpu.core_type<tc>, window_params = [{transform_indices = @transform_0, window_bounds = array<i64: 1, 16>}, {transform_indices = @transform_1, window_bounds = array<i64: 16, 128>}, {transform_indices = @transform_2, window_bounds = array<i64: 8, 128>}, {pipeline_mode = #tpu.pipeline_mode<synchronous>, transform_indices = @transform_3, window_bounds = array<i64: 128, 128>}, {pipeline_mode = #tpu.pipeline_mode<synchronous>, transform_indices = @transform_4, window_bounds = array<i64: 128, 128>}, {pipeline_mode = #tpu.pipeline_mode<synchronous>, transform_indices = @transform_5, window_bounds = array<i64: 1, 128>}, {transform_indices = @transform_6, window_bounds = array<i64: 8, 128>}]} {
    %c0_i32 = arith.constant 0 : i32
    %0 = arith.cmpi eq, %arg1, %c0_i32 : i32
    %1 = arith.extui %0 : i1 to i32
    %c0_i32_0 = arith.constant 0 : i32
    %2 = arith.cmpi ne, %1, %c0_i32_0 : i32
    scf.if %2 {
      %cst = arith.constant 0.000000e+00 : f32
      %14 = vector.broadcast %cst : f32 to vector<8x128xf32>
      %c0 = arith.constant 0 : index
      %c0_4 = arith.constant 0 : index
      %15 = vector.load %arg11[%c0, %c0_4] : memref<8x128xf32, #tpu.memory_space<vmem>>, vector<8x128xf32>
      tpu.vector_store %arg11[%c0, %c0_4], %14 {strides = array<i32>} : memref<8x128xf32, #tpu.memory_space<vmem>>, vector<8x128xf32>,
      %cst_5 = arith.constant 0.000000e+00 : f32
      %16 = vector.broadcast %cst_5 : f32 to vector<8x1xf32>
      %c0_6 = arith.constant 0 : index
      %c0_7 = arith.constant 0 : index
      %17 = vector.load %arg12[%c0_6, %c0_7] : memref<8x1xf32, #tpu.memory_space<vmem>>, vector<8x1xf32>
      tpu.vector_store %arg12[%c0_6, %c0_7], %16 {strides = array<i32>} : memref<8x1xf32, #tpu.memory_space<vmem>>, vector<8x1xf32>,
    } else {
    }
    %3 = arith.index_cast %arg0 : i32 to index
    %4 = memref.load %arg2[%3] : memref<1xi32, #tpu.memory_space<smem>>
    %5 = arith.index_cast %arg0 : i32 to index
    %6 = memref.load %arg3[%5] : memref<1xi32, #tpu.memory_space<smem>>
    %7 = arith.subi %6, %4 : i32
    %8 = arith.cmpi sle, %arg1, %7 : i32
    %9 = arith.extui %8 : i1 to i32
    %c0_i32_1 = arith.constant 0 : i32
    %10 = arith.cmpi ne, %9, %c0_i32_1 : i32
    scf.if %10 {
      %c8_i32 = arith.constant 8 : i32
      %14 = arith.muli %arg0, %c8_i32 : i32
      %15 = tpu.iota {dimensions = array<i32: 0>} : vector<8x16xi32>
      %16 = vector.broadcast %14 : i32 to vector<8x16xi32>
      %17 = arith.addi %16, %15 : vector<8x16xi32>
      %c0 = arith.constant 0 : index
      %c0_4 = arith.constant 0 : index
      %18 = vector.load %arg4[%c0, %c0_4] : memref<1x16xi32, #tpu.memory_space<vmem>>, vector<1x16xi32>
      %19 = vector.broadcast %18 : vector<1x16xi32> to vector<8x16xi32>
      %20 = arith.cmpi eq, %17, %19 : vector<8x16xi32>
      %21 = arith.extui %20 : vector<8x16xi1> to vector<8x16xi32>
      %22 = arith.sitofp %21 : vector<8x16xi32> to vector<8x16xf32>
      %23 = arith.truncf %22 : vector<8x16xf32> to vector<8x16xbf16>
      %c0_5 = arith.constant 0 : index
      %c0_6 = arith.constant 0 : index
      %24 = vector.load %arg11[%c0_5, %c0_6] : memref<8x128xf32, #tpu.memory_space<vmem>>, vector<8x128xf32>
      %c0_7 = arith.constant 0 : index
      %c0_8 = arith.constant 0 : index
      %25 = vector.load %arg5[%c0_7, %c0_8] : memref<16x128xbf16, #tpu.memory_space<vmem>>, vector<16x128xbf16>
      %cst = arith.constant dense<0.000000e+00> : vector<8x128xf32>
      %26 = tpu.matmul %23, %25, %cst {dimension_numbers = #tpu.dot_dimension_numbers<[1], [0], [0], [1], [0, 0, 1, 1], [], []>} : vector<8x16xbf16>, vector<16x128xbf16>, vector<8x128xf32> -> vector<8x128xf32>
      %27 = arith.addf %24, %26 : vector<8x128xf32>
      %c0_9 = arith.constant 0 : index
      %c0_10 = arith.constant 0 : index
      %28 = vector.load %arg11[%c0_9, %c0_10] : memref<8x128xf32, #tpu.memory_space<vmem>>, vector<8x128xf32>
      tpu.vector_store %arg11[%c0_9, %c0_10], %27 {strides = array<i32>} : memref<8x128xf32, #tpu.memory_space<vmem>>, vector<8x128xf32>,
      %c0_11 = arith.constant 0 : index
      %c0_12 = arith.constant 0 : index
      %29 = vector.load %arg12[%c0_11, %c0_12] : memref<8x1xf32, #tpu.memory_space<vmem>>, vector<8x1xf32>
      %30 = arith.extui %20 : vector<8x16xi1> to vector<8x16xi32>
      %31 = arith.sitofp %30 : vector<8x16xi32> to vector<8x16xf32>
      %cst_13 = arith.constant dense<0.000000e+00> : vector<8xf32>
      %32 = vector.multi_reduction <add>, %31, %cst_13 [1] : vector<8x16xf32> to vector<8xf32>
      %33 = vector.shape_cast %32 : vector<8xf32> to vector<8x1xf32>
      %34 = arith.addf %29, %33 : vector<8x1xf32>
      %c0_14 = arith.constant 0 : index
      %c0_15 = arith.constant 0 : index
      %35 = vector.load %arg12[%c0_14, %c0_15] : memref<8x1xf32, #tpu.memory_space<vmem>>, vector<8x1xf32>
      tpu.vector_store %arg12[%c0_14, %c0_15], %34 {strides = array<i32>} : memref<8x1xf32, #tpu.memory_space<vmem>>, vector<8x1xf32>,
    } else {
    }
    %c0_i32_2 = arith.constant 0 : i32
    %11 = arith.cmpi eq, %arg1, %c0_i32_2 : i32
    %12 = arith.extui %11 : i1 to i32
    %c0_i32_3 = arith.constant 0 : i32
    %13 = arith.cmpi ne, %12, %c0_i32_3 : i32
    scf.if %13 {
      %c0 = arith.constant 0 : index
      %c0_4 = arith.constant 0 : index
      %14 = vector.load %arg11[%c0, %c0_4] : memref<8x128xf32, #tpu.memory_space<vmem>>, vector<8x128xf32>
      %c0_5 = arith.constant 0 : index
      %c0_6 = arith.constant 0 : index
      %15 = vector.load %arg12[%c0_5, %c0_6] : memref<8x1xf32, #tpu.memory_space<vmem>>, vector<8x1xf32>
      %cst = arith.constant 1.000000e+00 : f32
      %16 = vector.broadcast %cst : f32 to vector<8x1xf32>
      %17 = arith.maximumf %15, %16 : vector<8x1xf32>
      %18 = vector.broadcast %17 : vector<8x1xf32> to vector<8x128xf32>
      %19 = arith.divf %14, %18 : vector<8x128xf32>
      %c0_7 = arith.constant 0 : index
      %c0_8 = arith.constant 0 : index
      %20 = vector.load %arg6[%c0_7, %c0_8] : memref<8x128xbf16, #tpu.memory_space<vmem>>, vector<8x128xbf16>
      %c0_9 = arith.constant 0 : index
      %c0_10 = arith.constant 0 : index
      %21 = vector.load %arg7[%c0_9, %c0_10] : memref<128x128xbf16, #tpu.memory_space<vmem>>, vector<128x128xbf16>
      %cst_11 = arith.constant dense<0.000000e+00> : vector<8x128xf32>
      %22 = tpu.matmul %20, %21, %cst_11 {dimension_numbers = #tpu.dot_dimension_numbers<[1], [0], [0], [1], [0, 0, 1, 1], [], []>} : vector<8x128xbf16>, vector<128x128xbf16>, vector<8x128xf32> -> vector<8x128xf32>
      %23 = arith.truncf %19 : vector<8x128xf32> to vector<8x128xbf16>
      %c0_12 = arith.constant 0 : index
      %c0_13 = arith.constant 0 : index
      %24 = vector.load %arg8[%c0_12, %c0_13] : memref<128x128xbf16, #tpu.memory_space<vmem>>, vector<128x128xbf16>
      %cst_14 = arith.constant dense<0.000000e+00> : vector<8x128xf32>
      %25 = tpu.matmul %23, %24, %cst_14 {dimension_numbers = #tpu.dot_dimension_numbers<[1], [0], [0], [1], [0, 0, 1, 1], [], []>} : vector<8x128xbf16>, vector<128x128xbf16>, vector<8x128xf32> -> vector<8x128xf32>
      %26 = arith.addf %22, %25 : vector<8x128xf32>
      %c0_15 = arith.constant 0 : index
      %c0_16 = arith.constant 0 : index
      %27 = vector.load %arg9[%c0_15, %c0_16] : memref<1x128xf32, #tpu.memory_space<vmem>>, vector<1x128xf32>
      %28 = vector.broadcast %27 : vector<1x128xf32> to vector<8x128xf32>
      %29 = arith.addf %26, %28 : vector<8x128xf32>
      %cst_17 = arith.constant 0.000000e+00 : f32
      %30 = vector.broadcast %cst_17 : f32 to vector<8x128xf32>
      %31 = arith.maximumf %29, %30 : vector<8x128xf32>
      %32 = arith.truncf %31 : vector<8x128xf32> to vector<8x128xbf16>
      %c0_18 = arith.constant 0 : index
      %c0_19 = arith.constant 0 : index
      %33 = vector.load %arg10[%c0_18, %c0_19] : memref<8x128xbf16, #tpu.memory_space<vmem>>, vector<8x128xbf16>
      tpu.vector_store %arg10[%c0_18, %c0_19], %32 {strides = array<i32>} : memref<8x128xbf16, #tpu.memory_space<vmem>>, vector<8x128xbf16>,
    } else {
    }
    return
  }
  func.func @transform_0(%arg0: i32, %arg1: i32, %arg2: memref<1xi32, #tpu.memory_space<smem>>, %arg3: memref<1xi32, #tpu.memory_space<smem>>) -> (i32, i32) {
    %0 = arith.index_cast %arg0 : i32 to index
    %1 = memref.load %arg2[%0] : memref<1xi32, #tpu.memory_space<smem>>
    %2 = arith.index_cast %arg0 : i32 to index
    %3 = memref.load %arg3[%2] : memref<1xi32, #tpu.memory_space<smem>>
    %4 = arith.maxsi %3, %1 : i32
    %5 = arith.addi %1, %arg1 : i32
    %6 = arith.minsi %5, %4 : i32
    %c0_i32 = arith.constant 0 : i32
    %c0_i32_0 = arith.constant 0 : i32
    return %c0_i32, %6 : i32, i32
  }
  func.func @transform_1(%arg0: i32, %arg1: i32, %arg2: memref<1xi32, #tpu.memory_space<smem>>, %arg3: memref<1xi32, #tpu.memory_space<smem>>) -> (i32, i32) {
    %0 = arith.index_cast %arg0 : i32 to index
    %1 = memref.load %arg2[%0] : memref<1xi32, #tpu.memory_space<smem>>
    %2 = arith.index_cast %arg0 : i32 to index
    %3 = memref.load %arg3[%2] : memref<1xi32, #tpu.memory_space<smem>>
    %4 = arith.maxsi %3, %1 : i32
    %5 = arith.addi %1, %arg1 : i32
    %6 = arith.minsi %5, %4 : i32
    %c0_i32 = arith.constant 0 : i32
    %c0_i32_0 = arith.constant 0 : i32
    return %6, %c0_i32 : i32, i32
  }
  func.func @transform_2(%arg0: i32, %arg1: i32, %arg2: memref<1xi32, #tpu.memory_space<smem>>, %arg3: memref<1xi32, #tpu.memory_space<smem>>) -> (i32, i32) {
    %c0_i32 = arith.constant 0 : i32
    %c0_i32_0 = arith.constant 0 : i32
    return %arg0, %c0_i32 : i32, i32
  }
  func.func @transform_3(%arg0: i32, %arg1: i32, %arg2: memref<1xi32, #tpu.memory_space<smem>>, %arg3: memref<1xi32, #tpu.memory_space<smem>>) -> (i32, i32) {
    %c0_i32 = arith.constant 0 : i32
    %c0_i32_0 = arith.constant 0 : i32
    %c0_i32_1 = arith.constant 0 : i32
    return %c0_i32, %c0_i32_0 : i32, i32
  }
  func.func @transform_4(%arg0: i32, %arg1: i32, %arg2: memref<1xi32, #tpu.memory_space<smem>>, %arg3: memref<1xi32, #tpu.memory_space<smem>>) -> (i32, i32) {
    %c0_i32 = arith.constant 0 : i32
    %c0_i32_0 = arith.constant 0 : i32
    %c0_i32_1 = arith.constant 0 : i32
    return %c0_i32, %c0_i32_0 : i32, i32
  }
  func.func @transform_5(%arg0: i32, %arg1: i32, %arg2: memref<1xi32, #tpu.memory_space<smem>>, %arg3: memref<1xi32, #tpu.memory_space<smem>>) -> (i32, i32) {
    %c0_i32 = arith.constant 0 : i32
    %c0_i32_0 = arith.constant 0 : i32
    %c0_i32_1 = arith.constant 0 : i32
    return %c0_i32, %c0_i32_0 : i32, i32
  }
  func.func @transform_6(%arg0: i32, %arg1: i32, %arg2: memref<1xi32, #tpu.memory_space<smem>>, %arg3: memref<1xi32, #tpu.memory_space<smem>>) -> (i32, i32) {
    %c0_i32 = arith.constant 0 : i32
    %c0_i32_0 = arith.constant 0 : i32
    return %arg0, %c0_i32 : i32, i32
  }
}

module attributes {stable_mosaic.version = 11 : i64} {
  func.func @_dual_linear_kernel(%arg0: i32, %arg1: memref<16x128xbf16, #tpu.memory_space<vmem>>, %arg2: memref<16x128xbf16, #tpu.memory_space<vmem>>, %arg3: memref<128x128xbf16, #tpu.memory_space<vmem>>, %arg4: memref<128x128xbf16, #tpu.memory_space<vmem>>, %arg5: memref<1x128xf32, #tpu.memory_space<vmem>>, %arg6: memref<16x128xf32, #tpu.memory_space<vmem>>) attributes {dimension_semantics = [#tpu.dimension_semantics<parallel>], iteration_bounds = array<i64: 1>, scalar_prefetch = 0 : i64, scratch_operands = 0 : i64, tpu.core_type = #tpu.core_type<tc>, window_params = [{transform_indices = @transform_0, window_bounds = array<i64: 16, 128>}, {transform_indices = @transform_1, window_bounds = array<i64: 16, 128>}, {pipeline_mode = #tpu.pipeline_mode<synchronous>, transform_indices = @transform_2, window_bounds = array<i64: 128, 128>}, {pipeline_mode = #tpu.pipeline_mode<synchronous>, transform_indices = @transform_3, window_bounds = array<i64: 128, 128>}, {pipeline_mode = #tpu.pipeline_mode<synchronous>, transform_indices = @transform_4, window_bounds = array<i64: 1, 128>}, {transform_indices = @transform_5, window_bounds = array<i64: 16, 128>}]} {
    %c0 = arith.constant 0 : index
    %c0_0 = arith.constant 0 : index
    %0 = vector.load %arg1[%c0, %c0_0] : memref<16x128xbf16, #tpu.memory_space<vmem>>, vector<16x128xbf16>
    %c0_1 = arith.constant 0 : index
    %c0_2 = arith.constant 0 : index
    %1 = vector.load %arg3[%c0_1, %c0_2] : memref<128x128xbf16, #tpu.memory_space<vmem>>, vector<128x128xbf16>
    %cst = arith.constant dense<0.000000e+00> : vector<16x128xf32>
    %2 = tpu.matmul %0, %1, %cst {dimension_numbers = #tpu.dot_dimension_numbers<[1], [0], [0], [1], [0, 0, 1, 1], [], []>} : vector<16x128xbf16>, vector<128x128xbf16>, vector<16x128xf32> -> vector<16x128xf32>
    %c0_3 = arith.constant 0 : index
    %c0_4 = arith.constant 0 : index
    %3 = vector.load %arg2[%c0_3, %c0_4] : memref<16x128xbf16, #tpu.memory_space<vmem>>, vector<16x128xbf16>
    %c0_5 = arith.constant 0 : index
    %c0_6 = arith.constant 0 : index
    %4 = vector.load %arg4[%c0_5, %c0_6] : memref<128x128xbf16, #tpu.memory_space<vmem>>, vector<128x128xbf16>
    %cst_7 = arith.constant dense<0.000000e+00> : vector<16x128xf32>
    %5 = tpu.matmul %3, %4, %cst_7 {dimension_numbers = #tpu.dot_dimension_numbers<[1], [0], [0], [1], [0, 0, 1, 1], [], []>} : vector<16x128xbf16>, vector<128x128xbf16>, vector<16x128xf32> -> vector<16x128xf32>
    %6 = arith.addf %2, %5 : vector<16x128xf32>
    %c0_8 = arith.constant 0 : index
    %c0_9 = arith.constant 0 : index
    %7 = vector.load %arg5[%c0_8, %c0_9] : memref<1x128xf32, #tpu.memory_space<vmem>>, vector<1x128xf32>
    %8 = vector.broadcast %7 : vector<1x128xf32> to vector<16x128xf32>
    %9 = arith.addf %6, %8 : vector<16x128xf32>
    %c0_10 = arith.constant 0 : index
    %c0_11 = arith.constant 0 : index
    %10 = vector.load %arg6[%c0_10, %c0_11] : memref<16x128xf32, #tpu.memory_space<vmem>>, vector<16x128xf32>
    tpu.vector_store %arg6[%c0_10, %c0_11], %9 {strides = array<i32>} : memref<16x128xf32, #tpu.memory_space<vmem>>, vector<16x128xf32>,
    return
  }
  func.func @transform_0(%arg0: i32) -> (i32, i32) {
    %c0_i32 = arith.constant 0 : i32
    %c0_i32_0 = arith.constant 0 : i32
    return %arg0, %c0_i32 : i32, i32
  }
  func.func @transform_1(%arg0: i32) -> (i32, i32) {
    %c0_i32 = arith.constant 0 : i32
    %c0_i32_0 = arith.constant 0 : i32
    return %arg0, %c0_i32 : i32, i32
  }
  func.func @transform_2(%arg0: i32) -> (i32, i32) {
    %c0_i32 = arith.constant 0 : i32
    %c0_i32_0 = arith.constant 0 : i32
    %c0_i32_1 = arith.constant 0 : i32
    return %c0_i32, %c0_i32_0 : i32, i32
  }
  func.func @transform_3(%arg0: i32) -> (i32, i32) {
    %c0_i32 = arith.constant 0 : i32
    %c0_i32_0 = arith.constant 0 : i32
    %c0_i32_1 = arith.constant 0 : i32
    return %c0_i32, %c0_i32_0 : i32, i32
  }
  func.func @transform_4(%arg0: i32) -> (i32, i32) {
    %c0_i32 = arith.constant 0 : i32
    %c0_i32_0 = arith.constant 0 : i32
    %c0_i32_1 = arith.constant 0 : i32
    return %c0_i32, %c0_i32_0 : i32, i32
  }
  func.func @transform_5(%arg0: i32) -> (i32, i32) {
    %c0_i32 = arith.constant 0 : i32
    %c0_i32_0 = arith.constant 0 : i32
    return %arg0, %c0_i32 : i32, i32
  }
}

</mosaic_0001>

<llo_original>
// kernel: model_forward.5
$region0: #{model_forward.5}
  #allocation0 [shape = 'u32[]', space=smem, size = 0x4, offset = 0x4, fixed_abs, tag = 'smem constant byte address 0x4 - core index']
  #allocation1 [shape = 'u32[72,128]{1,0:T(1,128)}', space=vmem, size = 0x9000, scoped, tag = 'internal scratch']
  %s0 = inlined_call_operand.vmem [shape: bf16[16,16], index: 0, kind: input, shape index: {}]
  %s1 = inlined_call_operand.vmem [shape: bf16[16,16], index: 1, kind: input, shape index: {}]
  %s2 = inlined_call_operand.vmem [shape: bf16[16,128], index: 2, kind: input, shape index: {}]
  %s3 = inlined_call_operand.vmem [shape: bf16[16,128], index: 3, kind: input, shape index: {}]
  %s4 = inlined_call_operand.vmem [shape: f32[1,128], index: 4, kind: input, shape index: {}]
  %s5 = inlined_call_operand.vmem [shape: bf16[16,128], index: 5, kind: output, shape index: {}]
  %s6 = sld [smem:[#allocation0]]
  $region30: #{model_forward.5} parent=0
    _
  %s8 = ssub.s32 1, %s6
  %s9 = scalar_select 0, %s8, %s6
  // Predicated region
  $region2: #{model_forward.5} parent=0 // pred_check
    _
  $region3: #{model_forward.5} parent=0 // pred_check_branch
    %11 = sbr.rel (0) target = $region5
  $region4: #{model_forward.5} parent=0 // pred_region
    _
  $region5: #{model_forward.5} parent=0 // pred_fallthru
    _
  // Predicated region
  $region6: #{model_forward.5} parent=0 // pred_check
    _
  $region7: #{model_forward.5} parent=0 // pred_check_branch
    %13 = sbr.rel (0) target = $region9
  $region8: #{model_forward.5} parent=0 // pred_region
    _
  $region9: #{model_forward.5} parent=0 // pred_fallthru
    _
  // Predicated region
  $region10: #{model_forward.5} parent=0 // pred_check
    _
  $region11: #{model_forward.5} parent=0 // pred_check_branch
    %15 = sbr.rel (0) target = $region13
  $region12: #{model_forward.5} parent=0 // pred_region
    _
  $region13: #{model_forward.5} parent=0 // pred_fallthru
    _
  // Predicated region
  $region14: #{model_forward.5} parent=0 // pred_check
    _
  $region15: #{model_forward.5} parent=0 // pred_check_branch
    %17 = sbr.rel (0) target = $region17
  $region16: #{model_forward.5} parent=0 // pred_region
    _
  $region17: #{model_forward.5} parent=0 // pred_fallthru
    _
  // Predicated region
  $region18: #{model_forward.5} parent=0 // pred_check
    _
  $region19: #{model_forward.5} parent=0 // pred_check_branch
    %19 = sbr.rel (0) target = $region21
  $region20: #{model_forward.5} parent=0 // pred_region
    _
  $region21: #{model_forward.5} parent=0 // pred_fallthru
    _
  %v21 = vld [vmem:[%s0] sm:$0xf]
  %v22 = vld [vmem:[%s0 + $0x4] sm:$0xf]
  %v23 = vld [vmem:[%s2] sm:$0xf]
  %v24 = vld [vmem:[%s2 + $0x4] sm:$0xf]
  %v25 = vld [vmem:[%s1] sm:$0xf]
  %v26 = vld [vmem:[%s1 + $0x4] sm:$0xf]
  %v27 = vld [vmem:[%s3] sm:$0xf]
  %v28 = vld [vmem:[%s3 + $0x4] sm:$0xf]
  %v31 = vunpack.c.l.b16 %v25
  %v32 = vunpack.c.l.b16 %v26
  %v33 = vpack.c.b16 %v32, %v31
  %v36 = vunpack.c.l.b16 %v27
  %v37 = vunpack.c.l.b16 %v28
  %v38 = vpack.c.b16 %v37, %v36
  %vm40 = vcmask 130048
  %v42 = vsel %vm40, %v33, 0
  %44 = vmatpush.bf16.msra.mxu0 0
  %45 = vmatpush.bf16.msra.mxu0 0
  %46 = vmatpush.bf16.msra.mxu0 0
  %47 = vmatpush.bf16.msra.mxu0 0
  %48 = vmatpush.bf16.msra.mxu0 0
  %49 = vmatpush.bf16.msra.mxu0 0
  %50 = vmatpush.bf16.msra.mxu0 0
  %51 = vmatpush.bf16.msra.mxu0 %v38
  %52 = vmatmul.bf16.gmra.mxu0 %v42
  %v53 = vpop.f32.mrf.mxu0
  %v54 = vadd.f32 0.0, %v53
  %v55 = vpop.f32.mrf.mxu0
  %v56 = vadd.f32 0.0, %v55
  %57 = vdwg.mxu0
  %v60 = vunpack.c.l.b16 %v21
  %v61 = vunpack.c.l.b16 %v22
  %v62 = vpack.c.b16 %v61, %v60
  %v65 = vunpack.c.l.b16 %v23
  %v66 = vunpack.c.l.b16 %v24
  %v67 = vpack.c.b16 %v66, %v65
  %v70 = vsel %vm40, %v62, 0
  %72 = vmatpush.bf16.msra.mxu0 0
  %73 = vmatpush.bf16.msra.mxu0 0
  %74 = vmatpush.bf16.msra.mxu0 0
  %75 = vmatpush.bf16.msra.mxu0 0
  %76 = vmatpush.bf16.msra.mxu0 0
  %77 = vmatpush.bf16.msra.mxu0 0
  %78 = vmatpush.bf16.msra.mxu0 0
  %79 = vmatpush.bf16.msra.mxu0 %v67
  %80 = vmatmul.bf16.gmra.mxu0 %v70
  %v81 = vpop.f32.mrf.mxu0
  %v82 = vadd.f32 %v54, %v81
  %v83 = vpop.f32.mrf.mxu0
  %v84 = vadd.f32 %v56, %v83
  %85 = vdwg.mxu0
  %v86 = vld [vmem:[%s4] sm:$0x1]
  %v88 = vperm.slane %v86, 0
  %v90 = vadd.f32 %v82, %v88
  %v91 = vadd.f32 %v84, %v88
  %v92 = vpack.c.bf16 %v90, %v90
  %v93 = vpack.c.bf16 %v91, %v91
  %94 = vst [vmem:[%s5] sm:$0xf] %v92
  %95 = vst [vmem:[%s5 + $0x4] sm:$0xf] %v93
  // Predicated region
  $region22: #{model_forward.5} parent=0 // pred_check
    _
  $region23: #{model_forward.5} parent=0 // pred_check_branch
    %97 = sbr.rel (0) target = $region25
  $region24: #{model_forward.5} parent=0 // pred_region
    _
  $region25: #{model_forward.5} parent=0 // pred_fallthru
    _
  // Predicated region
  $region26: #{model_forward.5} parent=0 // pred_check
    _
  $region27: #{model_forward.5} parent=0 // pred_check_branch
    %99 = sbr.rel (0) target = $region29
  $region28: #{model_forward.5} parent=0 // pred_region
    _
  $region29: #{model_forward.5} parent=0 // pred_fallthru
    _

// kernel: model_forward.7
$region0: #{model_forward.7}
  #allocation0 [shape = 'u32[]', space=smem, size = 0x4, offset = 0x4, fixed_abs, tag = 'smem constant byte address 0x4 - core index']
  #allocation1 [shape = 'u32[72,128]{1,0:T(1,128)}', space=vmem, size = 0x9000, scoped, tag = 'internal scratch']
  %s0 = inlined_call_operand.vmem [shape: bf16[16,128], index: 0, kind: input, shape index: {}]
  %s1 = inlined_call_operand.vmem [shape: bf16[16,16], index: 1, kind: input, shape index: {}]
  %s2 = inlined_call_operand.vmem [shape: bf16[128,128], index: 2, kind: input, shape index: {}]
  %s3 = inlined_call_operand.vmem [shape: bf16[16,128], index: 3, kind: input, shape index: {}]
  %s4 = inlined_call_operand.vmem [shape: f32[1,128], index: 4, kind: input, shape index: {}]
  %s5 = inlined_call_operand.vmem [shape: bf16[16,128], index: 5, kind: output, shape index: {}]
  %s6 = sld [smem:[#allocation0]]
  $region30: #{model_forward.7} parent=0
    _
  %s8 = ssub.s32 1, %s6
  %s9 = scalar_select 0, %s8, %s6
  // Predicated region
  $region2: #{model_forward.7} parent=0 // pred_check
    _
  $region3: #{model_forward.7} parent=0 // pred_check_branch
    %11 = sbr.rel (0) target = $region5
  $region4: #{model_forward.7} parent=0 // pred_region
    _
  $region5: #{model_forward.7} parent=0 // pred_fallthru
    _
  // Predicated region
  $region6: #{model_forward.7} parent=0 // pred_check
    _
  $region7: #{model_forward.7} parent=0 // pred_check_branch
    %13 = sbr.rel (0) target = $region9
  $region8: #{model_forward.7} parent=0 // pred_region
    _
  $region9: #{model_forward.7} parent=0 // pred_fallthru
    _
  // Predicated region
  $region10: #{model_forward.7} parent=0 // pred_check
    _
  $region11: #{model_forward.7} parent=0 // pred_check_branch
    %15 = sbr.rel (0) target = $region13
  $region12: #{model_forward.7} parent=0 // pred_region
    _
  $region13: #{model_forward.7} parent=0 // pred_fallthru
    _
  // Predicated region
  $region14: #{model_forward.7} parent=0 // pred_check
    _
  $region15: #{model_forward.7} parent=0 // pred_check_branch
    %17 = sbr.rel (0) target = $region17
  $region16: #{model_forward.7} parent=0 // pred_region
    _
  $region17: #{model_forward.7} parent=0 // pred_fallthru
    _
  // Predicated region
  $region18: #{model_forward.7} parent=0 // pred_check
    _
  $region19: #{model_forward.7} parent=0 // pred_check_branch
    %19 = sbr.rel (0) target = $region21
  $region20: #{model_forward.7} parent=0 // pred_region
    _
  $region21: #{model_forward.7} parent=0 // pred_fallthru
    _
  %v21 = vld [vmem:[%s0] sm:$0xf]
  %v22 = vld [vmem:[%s0 + $0x4] sm:$0xf]
  %v23 = vld [vmem:[%s2] sm:$0xf]
  %v24 = vld [vmem:[%s2 + $0x4] sm:$0xf]
  %v25 = vld [vmem:[%s2 + $0x8] sm:$0xf]
  %v26 = vld [vmem:[%s2 + $0xc] sm:$0xf]
  %v27 = vld [vmem:[%s2 + $0x10] sm:$0xf]
  %v28 = vld [vmem:[%s2 + $0x14] sm:$0xf]
  %v29 = vld [vmem:[%s2 + $0x18] sm:$0xf]
  %v30 = vld [vmem:[%s2 + $0x1c] sm:$0xf]
  %v31 = vld [vmem:[%s2 + $0x20] sm:$0xf]
  %v32 = vld [vmem:[%s2 + $0x24] sm:$0xf]
  %v33 = vld [vmem:[%s2 + $0x28] sm:$0xf]
  %v34 = vld [vmem:[%s2 + $0x2c] sm:$0xf]
  %v35 = vld [vmem:[%s2 + $0x30] sm:$0xf]
  %v36 = vld [vmem:[%s2 + $0x34] sm:$0xf]
  %v37 = vld [vmem:[%s2 + $0x38] sm:$0xf]
  %v38 = vld [vmem:[%s2 + $0x3c] sm:$0xf]
  %v39 = vld [vmem:[%s1] sm:$0xf]
  %v40 = vld [vmem:[%s1 + $0x4] sm:$0xf]
  %v41 = vld [vmem:[%s3] sm:$0xf]
  %v42 = vld [vmem:[%s3 + $0x4] sm:$0xf]
  %v45 = vunpack.c.l.b16 %v39
  %v46 = vunpack.c.l.b16 %v40
  %v47 = vpack.c.b16 %v46, %v45
  %v50 = vunpack.c.l.b16 %v41
  %v51 = vunpack.c.l.b16 %v42
  %v52 = vpack.c.b16 %v51, %v50
  %vm54 = vcmask 130048
  %v56 = vsel %vm54, %v47, 0
  %58 = vmatpush.bf16.msra.mxu0 0
  %59 = vmatpush.bf16.msra.mxu0 0
  %60 = vmatpush.bf16.msra.mxu0 0
  %61 = vmatpush.bf16.msra.mxu0 0
  %62 = vmatpush.bf16.msra.mxu0 0
  %63 = vmatpush.bf16.msra.mxu0 0
  %64 = vmatpush.bf16.msra.mxu0 0
  %65 = vmatpush.bf16.msra.mxu0 %v52
  %66 = vmatmul.bf16.gmra.mxu0 %v56
  %v67 = vpop.f32.mrf.mxu0
  %v68 = vadd.f32 0.0, %v67
  %v69 = vpop.f32.mrf.mxu0
  %v70 = vadd.f32 0.0, %v69
  %71 = vdwg.mxu0
  %v74 = vunpack.c.l.b16 %v21
  %v75 = vunpack.c.l.b16 %v22
  %v76 = vpack.c.b16 %v75, %v74
  %v94 = vunpack.c.l.b16 %v23
  %v95 = vunpack.c.l.b16 %v24
  %v96 = vunpack.c.l.b16 %v25
  %v97 = vunpack.c.l.b16 %v26
  %v98 = vunpack.c.l.b16 %v27
  %v99 = vunpack.c.l.b16 %v28
  %v100 = vunpack.c.l.b16 %v29
  %v101 = vunpack.c.l.b16 %v30
  %v102 = vunpack.c.l.b16 %v31
  %v103 = vunpack.c.l.b16 %v32
  %v104 = vunpack.c.l.b16 %v33
  %v105 = vunpack.c.l.b16 %v34
  %v106 = vunpack.c.l.b16 %v35
  %v107 = vunpack.c.l.b16 %v36
  %v108 = vunpack.c.l.b16 %v37
  %v109 = vunpack.c.l.b16 %v38
  %v110 = vpack.c.b16 %v95, %v94
  %v111 = vpack.c.b16 %v97, %v96
  %v112 = vpack.c.b16 %v99, %v98
  %v113 = vpack.c.b16 %v101, %v100
  %v114 = vpack.c.b16 %v103, %v102
  %v115 = vpack.c.b16 %v105, %v104
  %v116 = vpack.c.b16 %v107, %v106
  %v117 = vpack.c.b16 %v109, %v108
  %126 = vmatpush.bf16.msra.mxu0 %v117
  %127 = vmatpush.bf16.msra.mxu0 %v116
  %128 = vmatpush.bf16.msra.mxu0 %v115
  %129 = vmatpush.bf16.msra.mxu0 %v114
  %130 = vmatpush.bf16.msra.mxu0 %v113
  %131 = vmatpush.bf16.msra.mxu0 %v112
  %132 = vmatpush.bf16.msra.mxu0 %v111
  %133 = vmatpush.bf16.msra.mxu0 %v110
  %134 = vmatmul.bf16.gmra.mxu0 %v76
  %v135 = vpop.f32.mrf.mxu0
  %v136 = vadd.f32 %v68, %v135
  %v137 = vpop.f32.mrf.mxu0
  %v138 = vadd.f32 %v70, %v137
  %139 = vdwg.mxu0
  %v140 = vld [vmem:[%s4] sm:$0x1]
  %v142 = vperm.slane %v140, 0
  %v144 = vadd.f32 %v136, %v142
  %v145 = vadd.f32 %v138, %v142
  %v146 = vpack.c.bf16 %v144, %v144
  %v147 = vpack.c.bf16 %v145, %v145
  %148 = vst [vmem:[%s5] sm:$0xf] %v146
  %149 = vst [vmem:[%s5 + $0x4] sm:$0xf] %v147
  // Predicated region
  $region22: #{model_forward.7} parent=0 // pred_check
    _
  $region23: #{model_forward.7} parent=0 // pred_check_branch
    %151 = sbr.rel (0) target = $region25
  $region24: #{model_forward.7} parent=0 // pred_region
    _
  $region25: #{model_forward.7} parent=0 // pred_fallthru
    _
  // Predicated region
  $region26: #{model_forward.7} parent=0 // pred_check
    _
  $region27: #{model_forward.7} parent=0 // pred_check_branch
    %153 = sbr.rel (0) target = $region29
  $region28: #{model_forward.7} parent=0 // pred_region
    _
  $region29: #{model_forward.7} parent=0 // pred_fallthru
    _

// kernel: model_forward.6
$region0: #{model_forward.6}
  #allocation0 [shape = 'u32[]', space=smem, size = 0x4, offset = 0x4, fixed_abs, tag = 'smem constant byte address 0x4 - core index']
  #allocation1 [shape = 'u32[72,128]{1,0:T(1,128)}', space=vmem, size = 0x9000, scoped, tag = 'internal scratch']
  #allocation2 [shape = 'f32[8,128]{1,0:T(8,128)}', space=vmem, size = 0x1000, scoped, tag = 'scratch operand']
  #allocation3 [shape = 'f32[8,1]{1,0:T(8,128)}', space=vmem, size = 0x1000, scoped, tag = 'scratch operand']
  #allocation4 [shape = 's32[1]{0}', space=sflag, size = 0x4, scoped, tag = 'scoped memory for model_forward.6']
  #allocation5 [shape = 's32[1]{0:T(128)S(6)}', space=smem, size = 0x200, scoped, tag = 'prefetched SMEM operand 0']
  #allocation6 [shape = 's32[1]{0:T(128)S(6)}', space=smem, size = 0x200, scoped, tag = 'prefetched SMEM operand 1']
  %s0 = inlined_call_operand.<no memory space> [shape: s32[1], index: 0, kind: input, shape index: {}]
  %s1 = inlined_call_operand.<no memory space> [shape: s32[1], index: 1, kind: input, shape index: {}]
  %s2 = inlined_call_operand.vmem [shape: s32[1,16], index: 2, kind: input, shape index: {}]
  %s3 = inlined_call_operand.vmem [shape: bf16[16,128], index: 3, kind: input, shape index: {}]
  %s4 = inlined_call_operand.vmem [shape: bf16[8,16], index: 4, kind: input, shape index: {}]
  %s5 = inlined_call_operand.vmem [shape: bf16[16,128], index: 5, kind: input, shape index: {}]
  %s6 = inlined_call_operand.vmem [shape: bf16[128,128], index: 6, kind: input, shape index: {}]
  %s7 = inlined_call_operand.vmem [shape: f32[1,128], index: 7, kind: input, shape index: {}]
  %s8 = inlined_call_operand.vmem [shape: bf16[8,128], index: 8, kind: output, shape index: {}]
  %s9 = sld [smem:[#allocation0]]
  $region46: #{model_forward.6} parent=0
    _
  %s11 = ssub.s32 1, %s9
  %s12 = scalar_select 0, %s11, %s9
  %13 = sst [smem:[#allocation5]] %s0
  %14 = sst [smem:[#allocation6]] %s1
  // Predicated region
  $region2: #{model_forward.6} parent=0 // pred_check
    _
  $region3: #{model_forward.6} parent=0 // pred_check_branch
    %16 = sbr.rel (0) target = $region5
  $region4: #{model_forward.6} parent=0 // pred_region
    %s17 = sld [smem:[#allocation5]]
    %s18 = sld [smem:[#allocation6]]
    %p19 = scmp.gt.s32.totalorder %s18, %s17
    %s20 = scalar_select %p19, %s18, %s17
    %s21 = sadd.s32 %s17, 0
    %p22 = scmp.lt.s32.totalorder %s21, %s20
    %s23 = scalar_select %p22, %s21, %s20
    %p24 = scmp.lt.s32.totalorder %s23, 0
    %s25 = scalar_select %p24, %s23, 0
    %s26 = scalar_lea.vmem %s2, %s25
    %s27 = sld [smem:[#allocation5]]
    %s28 = sld [smem:[#allocation6]]
    %p29 = scmp.gt.s32.totalorder %s28, %s27
    %s30 = scalar_select %p29, %s28, %s27
    %s31 = sadd.s32 %s27, 0
    %p32 = scmp.lt.s32.totalorder %s31, %s30
    %s33 = scalar_select %p32, %s31, %s30
  $region5: #{model_forward.6} parent=0 // pred_fallthru
    _
  // Predicated region
  $region6: #{model_forward.6} parent=0 // pred_check
    _
  $region7: #{model_forward.6} parent=0 // pred_check_branch
    %35 = sbr.rel (0) target = $region9
  $region8: #{model_forward.6} parent=0 // pred_region
    %s36 = sld [smem:[#allocation5]]
    %s37 = sld [smem:[#allocation6]]
    %p38 = scmp.gt.s32.totalorder %s37, %s36
    %s39 = scalar_select %p38, %s37, %s36
    %s40 = sadd.s32 %s36, 0
    %p41 = scmp.lt.s32.totalorder %s40, %s39
    %s42 = scalar_select %p41, %s40, %s39
    %s43 = smul.u32 2, %s42
    %p44 = scmp.lt.s32.totalorder %s43, 1
    %s45 = scalar_select %p44, %s43, 1
    %s46 = smul.addr %s45, 4
    %s47 = scalar_lea.vmem %s3, %s46
    %s48 = sld [smem:[#allocation5]]
    %s49 = sld [smem:[#allocation6]]
    %p50 = scmp.gt.s32.totalorder %s49, %s48
    %s51 = scalar_select %p50, %s49, %s48
    %s52 = sadd.s32 %s48, 0
    %p53 = scmp.lt.s32.totalorder %s52, %s51
    %s54 = scalar_select %p53, %s52, %s51
    %s55 = smul.u32 2, %s54
  $region9: #{model_forward.6} parent=0 // pred_fallthru
    _
  // Predicated region
  $region10: #{model_forward.6} parent=0 // pred_check
    _
  $region11: #{model_forward.6} parent=0 // pred_check_branch
    %57 = sbr.rel (0) target = $region13
  $region12: #{model_forward.6} parent=0 // pred_region
    _
  $region13: #{model_forward.6} parent=0 // pred_fallthru
    _
  // Predicated region
  $region14: #{model_forward.6} parent=0 // pred_check
    _
  $region15: #{model_forward.6} parent=0 // pred_check_branch
    %59 = sbr.rel (0) target = $region17
  $region16: #{model_forward.6} parent=0 // pred_region
    _
  $region17: #{model_forward.6} parent=0 // pred_fallthru
    _
  // Predicated region
  $region18: #{model_forward.6} parent=0 // pred_check
    _
  $region19: #{model_forward.6} parent=0 // pred_check_branch
    %61 = sbr.rel (0) target = $region21
  $region20: #{model_forward.6} parent=0 // pred_region
    _
  $region21: #{model_forward.6} parent=0 // pred_fallthru
    _
  // Predicated region
  $region22: #{model_forward.6} parent=0 // pred_check
    _
  $region23: #{model_forward.6} parent=0 // pred_check_branch
    %63 = sbr.rel (0) target = $region25
  $region24: #{model_forward.6} parent=0 // pred_region
    _
  $region25: #{model_forward.6} parent=0 // pred_fallthru
    _
  %s64 = sld [smem:[#allocation5]]
  %s65 = sld [smem:[#allocation6]]
  %p66 = scmp.gt.s32.totalorder %s65, %s64
  %s67 = scalar_select %p66, %s65, %s64
  %s68 = sadd.s32 %s64, 0
  %p69 = scmp.lt.s32.totalorder %s68, %s67
  %s70 = scalar_select %p69, %s68, %s67
  %p71 = scmp.lt.s32.totalorder %s70, 0
  %s72 = scalar_select %p71, %s70, 0
  %s73 = scalar_lea.vmem %s2, %s72
  %s74 = sld [smem:[#allocation5]]
  %s75 = sld [smem:[#allocation6]]
  %p76 = scmp.gt.s32.totalorder %s75, %s74
  %s77 = scalar_select %p76, %s75, %s74
  %s78 = sadd.s32 %s74, 0
  %p79 = scmp.lt.s32.totalorder %s78, %s77
  %s80 = scalar_select %p79, %s78, %s77
  %s81 = smul.u32 2, %s80
  %p82 = scmp.lt.s32.totalorder %s81, 1
  %s83 = scalar_select %p82, %s81, 1
  %s84 = smul.addr %s83, 4
  %s85 = scalar_lea.vmem %s3, %s84
  %s86 = sld [smem:[#allocation5]]
  %s87 = sld [smem:[#allocation6]]
  %p88 = scmp.gt.s32.totalorder %s87, %s86
  %s89 = scalar_select %p88, %s87, %s86
  %s90 = sadd.s32 %s86, 0
  %p91 = scmp.lt.s32.totalorder %s90, %s89
  %s92 = scalar_select %p91, %s90, %s89
  %p93 = scmp.lt.s32.totalorder %s92, 0
  %s94 = scalar_select %p93, %s92, 0
  %s95 = scalar_lea.vmem %s2, %s94
  %s96 = sld [smem:[#allocation5]]
  %s97 = sld [smem:[#allocation6]]
  %p98 = scmp.gt.s32.totalorder %s97, %s96
  %s99 = scalar_select %p98, %s97, %s96
  %s100 = sadd.s32 %s96, 0
  %p101 = scmp.lt.s32.totalorder %s100, %s99
  %s102 = scalar_select %p101, %s100, %s99
  %s103 = sld [smem:[#allocation5]]
  %s104 = sld [smem:[#allocation6]]
  %p105 = scmp.gt.s32.totalorder %s104, %s103
  %s106 = scalar_select %p105, %s104, %s103
  %s107 = sadd.s32 %s103, 0
  %p108 = scmp.lt.s32.totalorder %s107, %s106
  %s109 = scalar_select %p108, %s107, %s106
  %s110 = smul.u32 2, %s109
  %p111 = scmp.lt.s32.totalorder %s110, 1
  %s112 = scalar_select %p111, %s110, 1
  %s113 = smul.addr %s112, 4
  %s114 = scalar_lea.vmem %s3, %s113
  %s115 = sld [smem:[#allocation5]]
  %s116 = sld [smem:[#allocation6]]
  %p117 = scmp.gt.s32.totalorder %s116, %s115
  %s118 = scalar_select %p117, %s116, %s115
  %s119 = sadd.s32 %s115, 0
  %p120 = scmp.lt.s32.totalorder %s119, %s118
  %s121 = scalar_select %p120, %s119, %s118
  %s122 = smul.u32 2, %s121
  %p124 = scmp.eq.s32.totalorder 0, 0
  // Predicated region
  $region26: #{model_forward.6} parent=0 // pred_check
    %p125 = pneg %p124
  $region27: #{model_forward.6} parent=0 // pred_check_branch
    %127 = sbr.rel (%p125) target = $region29
  $region28: #{model_forward.6} parent=0 // pred_region
    %128 = vst [vmem:[#allocation2] sm:$0xff] 0.0
    %vm129 = vcmask 7168
    %130 = vst.msk [vmem:[#allocation3] sm:$0xff] %vm129, 0.0
  $region29: #{model_forward.6} parent=0 // pred_fallthru
    _
  %s131 = sld [smem:[#allocation5]]
  %s132 = sld [smem:[#allocation6]]
  %s133 = ssub.s32 %s132, %s131
  %p134 = scmp.le.s32.totalorder 0, %s133
  // Predicated region
  $region30: #{model_forward.6} parent=0 // pred_check
    %p135 = pneg %p134
  $region31: #{model_forward.6} parent=0 // pred_check_branch
    %137 = sbr.rel (%p135) target = $region33
  $region32: #{model_forward.6} parent=0 // pred_region
    %s138 = smul.u32 0, 8
    %v139 = vlaneseq
    %v140 = vshrl.u32 %v139, 7
    %v141 = vstv %s138
    %v142 = vadd.s32 %v141, %v140
    %v143 = vld [vmem:[%s95] sm:$0x1]
    %v144 = vperm.slane %v143, 0
    %vm145 = vcmp.eq.s32.totalorder %v142, %v144
    %v146 = vsel %vm145, 1, 0
    %v147 = vcvt.s32.f32 %v146
    %v148 = vpack.c.bf16 %v147, %v147
    %v149 = vld [vmem:[#allocation2] sm:$0xff]
    %v150 = vld [vmem:[%s114] sm:$0xf]
    %v151 = vld [vmem:[%s114 + $0x4] sm:$0xf]
    %v154 = vunpack.c.l.b16 %v150
    %v155 = vunpack.c.l.b16 %v151
    %v156 = vpack.c.b16 %v155, %v154
    %vm158 = vcmask 130048
    %v160 = vsel %vm158, %v148, 0
    %162 = vmatpush.bf16.msra.mxu0 0
    %163 = vmatpush.bf16.msra.mxu0 0
    %164 = vmatpush.bf16.msra.mxu0 0
    %165 = vmatpush.bf16.msra.mxu0 0
    %166 = vmatpush.bf16.msra.mxu0 0
    %167 = vmatpush.bf16.msra.mxu0 0
    %168 = vmatpush.bf16.msra.mxu0 0
    %169 = vmatpush.bf16.msra.mxu0 %v156
    %170 = vmatmul.bf16.gmra.mxu0 %v160
    %v171 = vpop.f32.mrf.mxu0
    %v172 = vadd.f32 0.0, %v171
    %v173 = vpop.f32.mrf.mxu0
    %174 = vdwg.mxu0
    %v175 = vadd.f32 %v149, %v172
    %176 = vst [vmem:[#allocation2] sm:$0xff] %v175
    %v177 = vld [vmem:[#allocation3] sm:$0xff]
    %v178 = vsel %vm158, %v147, 0.0
    %179 = vadd.xlane.f32.xlu0 %v178
    %v180 = vpop.xlane.xlu0 %179
    %v181 = vadd.f32 %v177, %v180
    %vm182 = vcmask 7168
    %183 = vst.msk [vmem:[#allocation3] sm:$0xff] %vm182, %v181
  $region33: #{model_forward.6} parent=0 // pred_fallthru
    _
  // Predicated region
  $region34: #{model_forward.6} parent=0 // pred_check
    %p184 = pneg %p124
  $region35: #{model_forward.6} parent=0 // pred_check_branch
    %186 = sbr.rel (%p184) target = $region37
  $region36: #{model_forward.6} parent=0 // pred_region
    %v187 = vld [vmem:[#allocation2] sm:$0xff]
    %v188 = vld [vmem:[#allocation3] sm:$0xff]
    %v189 = vmax.f32 %v188, 1.0
    %191 = vset.pattern.permute.xlu0 0
    %192 = vperm.xlu0 %191, %v189
    %v193 = vpop.permute.xlu0 %192
    %v195 = vrcp.pop %v193
    %v196 = vmul.f32 %v193, %v195
    %v197 = vsub.f32 1.0, %v196
    %v198 = vmul.f32 %v195, %v197
    %v199 = vadd.f32 %v195, %v198
    %vm200 = vweird.f32 %v193
    %vm201 = vweird.f32 %v195
    %vm202 = vmor %vm200, %vm201
    %v203 = vsel %vm202, %v195, %v199
    %v204 = vand.u32 2147483647, %v193
    %vm205 = vcmp.eq.f32.partialorder %v204, 8.507059e+37
    %v206 = vand.u32 %v193, 2147483648
    %v207 = vor.u32 1.1754944e-38, %v206
    %v208 = vsel %vm205, %v207, %v203
    %v209 = vmul.f32 %v187, %v208
    %v210 = vld [vmem:[%s4] sm:$0xf]
    %v211 = vld [vmem:[%s5] sm:$0xf]
    %v212 = vld [vmem:[%s5 + $0x4] sm:$0xf]
    %v213 = vpack.c.bf16 %v209, %v209
    %v214 = vld [vmem:[%s6] sm:$0xf]
    %v215 = vld [vmem:[%s6 + $0x4] sm:$0xf]
    %v216 = vld [vmem:[%s6 + $0x8] sm:$0xf]
    %v217 = vld [vmem:[%s6 + $0xc] sm:$0xf]
    %v218 = vld [vmem:[%s6 + $0x10] sm:$0xf]
    %v219 = vld [vmem:[%s6 + $0x14] sm:$0xf]
    %v220 = vld [vmem:[%s6 + $0x18] sm:$0xf]
    %v221 = vld [vmem:[%s6 + $0x1c] sm:$0xf]
    %v222 = vld [vmem:[%s6 + $0x20] sm:$0xf]
    %v223 = vld [vmem:[%s6 + $0x24] sm:$0xf]
    %v224 = vld [vmem:[%s6 + $0x28] sm:$0xf]
    %v225 = vld [vmem:[%s6 + $0x2c] sm:$0xf]
    %v226 = vld [vmem:[%s6 + $0x30] sm:$0xf]
    %v227 = vld [vmem:[%s6 + $0x34] sm:$0xf]
    %v228 = vld [vmem:[%s6 + $0x38] sm:$0xf]
    %v229 = vld [vmem:[%s6 + $0x3c] sm:$0xf]
    %v246 = vunpack.c.l.b16 %v214
    %v247 = vunpack.c.l.b16 %v215
    %v248 = vunpack.c.l.b16 %v216
    %v249 = vunpack.c.l.b16 %v217
    %v250 = vunpack.c.l.b16 %v218
    %v251 = vunpack.c.l.b16 %v219
    %v252 = vunpack.c.l.b16 %v220
    %v253 = vunpack.c.l.b16 %v221
    %v254 = vunpack.c.l.b16 %v222
    %v255 = vunpack.c.l.b16 %v223
    %v256 = vunpack.c.l.b16 %v224
    %v257 = vunpack.c.l.b16 %v225
    %v258 = vunpack.c.l.b16 %v226
    %v259 = vunpack.c.l.b16 %v227
    %v260 = vunpack.c.l.b16 %v228
    %v261 = vunpack.c.l.b16 %v229
    %v262 = vpack.c.b16 %v247, %v246
    %v263 = vpack.c.b16 %v249, %v248
    %v264 = vpack.c.b16 %v251, %v250
    %v265 = vpack.c.b16 %v253, %v252
    %v266 = vpack.c.b16 %v255, %v254
    %v267 = vpack.c.b16 %v257, %v256
    %v268 = vpack.c.b16 %v259, %v258
    %v269 = vpack.c.b16 %v261, %v260
    %278 = vmatpush.bf16.msra.mxu0 %v269
    %279 = vmatpush.bf16.msra.mxu0 %v268
    %280 = vmatpush.bf16.msra.mxu0 %v267
    %281 = vmatpush.bf16.msra.mxu0 %v266
    %282 = vmatpush.bf16.msra.mxu0 %v265
    %283 = vmatpush.bf16.msra.mxu0 %v264
    %284 = vmatpush.bf16.msra.mxu0 %v263
    %285 = vmatpush.bf16.msra.mxu0 %v262
    %286 = vmatmul.bf16.gmra.mxu0 %v213
    %v287 = vpop.f32.mrf.mxu0
    %v288 = vadd.f32 0.0, %v287
    %v289 = vpop.f32.mrf.mxu0
    %290 = vdwg.mxu0
    %v293 = vunpack.c.l.b16 %v211
    %v294 = vunpack.c.l.b16 %v212
    %v295 = vpack.c.b16 %v294, %v293
    %vm297 = vcmask 130048
    %v299 = vsel %vm297, %v210, 0
    %301 = vmatpush.bf16.msra.mxu0 0
    %302 = vmatpush.bf16.msra.mxu0 0
    %303 = vmatpush.bf16.msra.mxu0 0
    %304 = vmatpush.bf16.msra.mxu0 0
    %305 = vmatpush.bf16.msra.mxu0 0
    %306 = vmatpush.bf16.msra.mxu0 0
    %307 = vmatpush.bf16.msra.mxu0 0
    %308 = vmatpush.bf16.msra.mxu0 %v295
    %309 = vmatmul.bf16.gmra.mxu0 %v299
    %v310 = vpop.f32.mrf.mxu0
    %v311 = vadd.f32 %v288, %v310
    %v312 = vpop.f32.mrf.mxu0
    %313 = vdwg.mxu0
    %v314 = vld [vmem:[%s7] sm:$0x1]
    %v316 = vperm.slane %v314, 0
    %v318 = vadd.f32 %v311, %v316
    %v319 = vmax.f32 %v318, 0.0
    %v320 = vpack.c.bf16 %v319, %v319
    %321 = vst [vmem:[%s8] sm:$0xf] %v320
  $region37: #{model_forward.6} parent=0 // pred_fallthru
    _
  // Predicated region
  $region38: #{model_forward.6} parent=0 // pred_check
    _
  $region39: #{model_forward.6} parent=0 // pred_check_branch
    %323 = sbr.rel (0) target = $region41
  $region40: #{model_forward.6} parent=0 // pred_region
    _
  $region41: #{model_forward.6} parent=0 // pred_fallthru
    _
  // Predicated region
  $region42: #{model_forward.6} parent=0 // pred_check
    _
  $region43: #{model_forward.6} parent=0 // pred_check_branch
    %325 = sbr.rel (0) target = $region45
  $region44: #{model_forward.6} parent=0 // pred_region
    _
  $region45: #{model_forward.6} parent=0 // pred_fallthru
    _

// kernel: model_forward.8
$region0: #{model_forward.8}
  #allocation0 [shape = 'u32[]', space=smem, size = 0x4, offset = 0x4, fixed_abs, tag = 'smem constant byte address 0x4 - core index']
  #allocation1 [shape = 'u32[72,128]{1,0:T(1,128)}', space=vmem, size = 0x9000, scoped, tag = 'internal scratch']
  #allocation2 [shape = 'f32[8,128]{1,0:T(8,128)}', space=vmem, size = 0x1000, scoped, tag = 'scratch operand']
  #allocation3 [shape = 'f32[8,1]{1,0:T(8,128)}', space=vmem, size = 0x1000, scoped, tag = 'scratch operand']
  #allocation4 [shape = 's32[1]{0}', space=sflag, size = 0x4, scoped, tag = 'scoped memory for model_forward.8']
  #allocation5 [shape = 's32[1]{0:T(128)S(6)}', space=smem, size = 0x200, scoped, tag = 'prefetched SMEM operand 0']
  #allocation6 [shape = 's32[1]{0:T(128)S(6)}', space=smem, size = 0x200, scoped, tag = 'prefetched SMEM operand 1']
  %s0 = inlined_call_operand.<no memory space> [shape: s32[1], index: 0, kind: input, shape index: {}]
  %s1 = inlined_call_operand.<no memory space> [shape: s32[1], index: 1, kind: input, shape index: {}]
  %s2 = inlined_call_operand.vmem [shape: s32[1,16], index: 2, kind: input, shape index: {}]
  %s3 = inlined_call_operand.vmem [shape: bf16[16,128], index: 3, kind: input, shape index: {}]
  %s4 = inlined_call_operand.vmem [shape: bf16[8,128], index: 4, kind: input, shape index: {}]
  %s5 = inlined_call_operand.vmem [shape: bf16[128,128], index: 5, kind: input, shape index: {}]
  %s6 = inlined_call_operand.vmem [shape: bf16[128,128], index: 6, kind: input, shape index: {}]
  %s7 = inlined_call_operand.vmem [shape: f32[1,128], index: 7, kind: input, shape index: {}]
  %s8 = inlined_call_operand.vmem [shape: bf16[8,128], index: 8, kind: output, shape index: {}]
  %s9 = sld [smem:[#allocation0]]
  $region46: #{model_forward.8} parent=0
    _
  %s11 = ssub.s32 1, %s9
  %s12 = scalar_select 0, %s11, %s9
  %13 = sst [smem:[#allocation5]] %s0
  %14 = sst [smem:[#allocation6]] %s1
  // Predicated region
  $region2: #{model_forward.8} parent=0 // pred_check
    _
  $region3: #{model_forward.8} parent=0 // pred_check_branch
    %16 = sbr.rel (0) target = $region5
  $region4: #{model_forward.8} parent=0 // pred_region
    %s17 = sld [smem:[#allocation5]]
    %s18 = sld [smem:[#allocation6]]
    %p19 = scmp.gt.s32.totalorder %s18, %s17
    %s20 = scalar_select %p19, %s18, %s17
    %s21 = sadd.s32 %s17, 0
    %p22 = scmp.lt.s32.totalorder %s21, %s20
    %s23 = scalar_select %p22, %s21, %s20
    %p24 = scmp.lt.s32.totalorder %s23, 0
    %s25 = scalar_select %p24, %s23, 0
    %s26 = scalar_lea.vmem %s2, %s25
    %s27 = sld [smem:[#allocation5]]
    %s28 = sld [smem:[#allocation6]]
    %p29 = scmp.gt.s32.totalorder %s28, %s27
    %s30 = scalar_select %p29, %s28, %s27
    %s31 = sadd.s32 %s27, 0
    %p32 = scmp.lt.s32.totalorder %s31, %s30
    %s33 = scalar_select %p32, %s31, %s30
  $region5: #{model_forward.8} parent=0 // pred_fallthru
    _
  // Predicated region
  $region6: #{model_forward.8} parent=0 // pred_check
    _
  $region7: #{model_forward.8} parent=0 // pred_check_branch
    %35 = sbr.rel (0) target = $region9
  $region8: #{model_forward.8} parent=0 // pred_region
    %s36 = sld [smem:[#allocation5]]
    %s37 = sld [smem:[#allocation6]]
    %p38 = scmp.gt.s32.totalorder %s37, %s36
    %s39 = scalar_select %p38, %s37, %s36
    %s40 = sadd.s32 %s36, 0
    %p41 = scmp.lt.s32.totalorder %s40, %s39
    %s42 = scalar_select %p41, %s40, %s39
    %s43 = smul.u32 2, %s42
    %p44 = scmp.lt.s32.totalorder %s43, 1
    %s45 = scalar_select %p44, %s43, 1
    %s46 = smul.addr %s45, 4
    %s47 = scalar_lea.vmem %s3, %s46
    %s48 = sld [smem:[#allocation5]]
    %s49 = sld [smem:[#allocation6]]
    %p50 = scmp.gt.s32.totalorder %s49, %s48
    %s51 = scalar_select %p50, %s49, %s48
    %s52 = sadd.s32 %s48, 0
    %p53 = scmp.lt.s32.totalorder %s52, %s51
    %s54 = scalar_select %p53, %s52, %s51
    %s55 = smul.u32 2, %s54
  $region9: #{model_forward.8} parent=0 // pred_fallthru
    _
  // Predicated region
  $region10: #{model_forward.8} parent=0 // pred_check
    _
  $region11: #{model_forward.8} parent=0 // pred_check_branch
    %57 = sbr.rel (0) target = $region13
  $region12: #{model_forward.8} parent=0 // pred_region
    _
  $region13: #{model_forward.8} parent=0 // pred_fallthru
    _
  // Predicated region
  $region14: #{model_forward.8} parent=0 // pred_check
    _
  $region15: #{model_forward.8} parent=0 // pred_check_branch
    %59 = sbr.rel (0) target = $region17
  $region16: #{model_forward.8} parent=0 // pred_region
    _
  $region17: #{model_forward.8} parent=0 // pred_fallthru
    _
  // Predicated region
  $region18: #{model_forward.8} parent=0 // pred_check
    _
  $region19: #{model_forward.8} parent=0 // pred_check_branch
    %61 = sbr.rel (0) target = $region21
  $region20: #{model_forward.8} parent=0 // pred_region
    _
  $region21: #{model_forward.8} parent=0 // pred_fallthru
    _
  // Predicated region
  $region22: #{model_forward.8} parent=0 // pred_check
    _
  $region23: #{model_forward.8} parent=0 // pred_check_branch
    %63 = sbr.rel (0) target = $region25
  $region24: #{model_forward.8} parent=0 // pred_region
    _
  $region25: #{model_forward.8} parent=0 // pred_fallthru
    _
  %s64 = sld [smem:[#allocation5]]
  %s65 = sld [smem:[#allocation6]]
  %p66 = scmp.gt.s32.totalorder %s65, %s64
  %s67 = scalar_select %p66, %s65, %s64
  %s68 = sadd.s32 %s64, 0
  %p69 = scmp.lt.s32.totalorder %s68, %s67
  %s70 = scalar_select %p69, %s68, %s67
  %p71 = scmp.lt.s32.totalorder %s70, 0
  %s72 = scalar_select %p71, %s70, 0
  %s73 = scalar_lea.vmem %s2, %s72
  %s74 = sld [smem:[#allocation5]]
  %s75 = sld [smem:[#allocation6]]
  %p76 = scmp.gt.s32.totalorder %s75, %s74
  %s77 = scalar_select %p76, %s75, %s74
  %s78 = sadd.s32 %s74, 0
  %p79 = scmp.lt.s32.totalorder %s78, %s77
  %s80 = scalar_select %p79, %s78, %s77
  %s81 = smul.u32 2, %s80
  %p82 = scmp.lt.s32.totalorder %s81, 1
  %s83 = scalar_select %p82, %s81, 1
  %s84 = smul.addr %s83, 4
  %s85 = scalar_lea.vmem %s3, %s84
  %s86 = sld [smem:[#allocation5]]
  %s87 = sld [smem:[#allocation6]]
  %p88 = scmp.gt.s32.totalorder %s87, %s86
  %s89 = scalar_select %p88, %s87, %s86
  %s90 = sadd.s32 %s86, 0
  %p91 = scmp.lt.s32.totalorder %s90, %s89
  %s92 = scalar_select %p91, %s90, %s89
  %p93 = scmp.lt.s32.totalorder %s92, 0
  %s94 = scalar_select %p93, %s92, 0
  %s95 = scalar_lea.vmem %s2, %s94
  %s96 = sld [smem:[#allocation5]]
  %s97 = sld [smem:[#allocation6]]
  %p98 = scmp.gt.s32.totalorder %s97, %s96
  %s99 = scalar_select %p98, %s97, %s96
  %s100 = sadd.s32 %s96, 0
  %p101 = scmp.lt.s32.totalorder %s100, %s99
  %s102 = scalar_select %p101, %s100, %s99
  %s103 = sld [smem:[#allocation5]]
  %s104 = sld [smem:[#allocation6]]
  %p105 = scmp.gt.s32.totalorder %s104, %s103
  %s106 = scalar_select %p105, %s104, %s103
  %s107 = sadd.s32 %s103, 0
  %p108 = scmp.lt.s32.totalorder %s107, %s106
  %s109 = scalar_select %p108, %s107, %s106
  %s110 = smul.u32 2, %s109
  %p111 = scmp.lt.s32.totalorder %s110, 1
  %s112 = scalar_select %p111, %s110, 1
  %s113 = smul.addr %s112, 4
  %s114 = scalar_lea.vmem %s3, %s113
  %s115 = sld [smem:[#allocation5]]
  %s116 = sld [smem:[#allocation6]]
  %p117 = scmp.gt.s32.totalorder %s116, %s115
  %s118 = scalar_select %p117, %s116, %s115
  %s119 = sadd.s32 %s115, 0
  %p120 = scmp.lt.s32.totalorder %s119, %s118
  %s121 = scalar_select %p120, %s119, %s118
  %s122 = smul.u32 2, %s121
  %p124 = scmp.eq.s32.totalorder 0, 0
  // Predicated region
  $region26: #{model_forward.8} parent=0 // pred_check
    %p125 = pneg %p124
  $region27: #{model_forward.8} parent=0 // pred_check_branch
    %127 = sbr.rel (%p125) target = $region29
  $region28: #{model_forward.8} parent=0 // pred_region
    %128 = vst [vmem:[#allocation2] sm:$0xff] 0.0
    %vm129 = vcmask 7168
    %130 = vst.msk [vmem:[#allocation3] sm:$0xff] %vm129, 0.0
  $region29: #{model_forward.8} parent=0 // pred_fallthru
    _
  %s131 = sld [smem:[#allocation5]]
  %s132 = sld [smem:[#allocation6]]
  %s133 = ssub.s32 %s132, %s131
  %p134 = scmp.le.s32.totalorder 0, %s133
  // Predicated region
  $region30: #{model_forward.8} parent=0 // pred_check
    %p135 = pneg %p134
  $region31: #{model_forward.8} parent=0 // pred_check_branch
    %137 = sbr.rel (%p135) target = $region33
  $region32: #{model_forward.8} parent=0 // pred_region
    %s138 = smul.u32 0, 8
    %v139 = vlaneseq
    %v140 = vshrl.u32 %v139, 7
    %v141 = vstv %s138
    %v142 = vadd.s32 %v141, %v140
    %v143 = vld [vmem:[%s95] sm:$0x1]
    %v144 = vperm.slane %v143, 0
    %vm145 = vcmp.eq.s32.totalorder %v142, %v144
    %v146 = vsel %vm145, 1, 0
    %v147 = vcvt.s32.f32 %v146
    %v148 = vpack.c.bf16 %v147, %v147
    %v149 = vld [vmem:[#allocation2] sm:$0xff]
    %v150 = vld [vmem:[%s114] sm:$0xf]
    %v151 = vld [vmem:[%s114 + $0x4] sm:$0xf]
    %v154 = vunpack.c.l.b16 %v150
    %v155 = vunpack.c.l.b16 %v151
    %v156 = vpack.c.b16 %v155, %v154
    %vm158 = vcmask 130048
    %v160 = vsel %vm158, %v148, 0
    %162 = vmatpush.bf16.msra.mxu0 0
    %163 = vmatpush.bf16.msra.mxu0 0
    %164 = vmatpush.bf16.msra.mxu0 0
    %165 = vmatpush.bf16.msra.mxu0 0
    %166 = vmatpush.bf16.msra.mxu0 0
    %167 = vmatpush.bf16.msra.mxu0 0
    %168 = vmatpush.bf16.msra.mxu0 0
    %169 = vmatpush.bf16.msra.mxu0 %v156
    %170 = vmatmul.bf16.gmra.mxu0 %v160
    %v171 = vpop.f32.mrf.mxu0
    %v172 = vadd.f32 0.0, %v171
    %v173 = vpop.f32.mrf.mxu0
    %174 = vdwg.mxu0
    %v175 = vadd.f32 %v149, %v172
    %176 = vst [vmem:[#allocation2] sm:$0xff] %v175
    %v177 = vld [vmem:[#allocation3] sm:$0xff]
    %v178 = vsel %vm158, %v147, 0.0
    %179 = vadd.xlane.f32.xlu0 %v178
    %v180 = vpop.xlane.xlu0 %179
    %v181 = vadd.f32 %v177, %v180
    %vm182 = vcmask 7168
    %183 = vst.msk [vmem:[#allocation3] sm:$0xff] %vm182, %v181
  $region33: #{model_forward.8} parent=0 // pred_fallthru
    _
  // Predicated region
  $region34: #{model_forward.8} parent=0 // pred_check
    %p184 = pneg %p124
  $region35: #{model_forward.8} parent=0 // pred_check_branch
    %186 = sbr.rel (%p184) target = $region37
  $region36: #{model_forward.8} parent=0 // pred_region
    %v187 = vld [vmem:[#allocation2] sm:$0xff]
    %v188 = vld [vmem:[#allocation3] sm:$0xff]
    %v189 = vmax.f32 %v188, 1.0
    %191 = vset.pattern.permute.xlu0 0
    %192 = vperm.xlu0 %191, %v189
    %v193 = vpop.permute.xlu0 %192
    %v195 = vrcp.pop %v193
    %v196 = vmul.f32 %v193, %v195
    %v197 = vsub.f32 1.0, %v196
    %v198 = vmul.f32 %v195, %v197
    %v199 = vadd.f32 %v195, %v198
    %vm200 = vweird.f32 %v193
    %vm201 = vweird.f32 %v195
    %vm202 = vmor %vm200, %vm201
    %v203 = vsel %vm202, %v195, %v199
    %v204 = vand.u32 2147483647, %v193
    %vm205 = vcmp.eq.f32.partialorder %v204, 8.507059e+37
    %v206 = vand.u32 %v193, 2147483648
    %v207 = vor.u32 1.1754944e-38, %v206
    %v208 = vsel %vm205, %v207, %v203
    %v209 = vmul.f32 %v187, %v208
    %v210 = vld [vmem:[%s4] sm:$0xf]
    %v211 = vld [vmem:[%s5] sm:$0xf]
    %v212 = vld [vmem:[%s5 + $0x4] sm:$0xf]
    %v213 = vld [vmem:[%s5 + $0x8] sm:$0xf]
    %v214 = vld [vmem:[%s5 + $0xc] sm:$0xf]
    %v215 = vld [vmem:[%s5 + $0x10] sm:$0xf]
    %v216 = vld [vmem:[%s5 + $0x14] sm:$0xf]
    %v217 = vld [vmem:[%s5 + $0x18] sm:$0xf]
    %v218 = vld [vmem:[%s5 + $0x1c] sm:$0xf]
    %v219 = vld [vmem:[%s5 + $0x20] sm:$0xf]
    %v220 = vld [vmem:[%s5 + $0x24] sm:$0xf]
    %v221 = vld [vmem:[%s5 + $0x28] sm:$0xf]
    %v222 = vld [vmem:[%s5 + $0x2c] sm:$0xf]
    %v223 = vld [vmem:[%s5 + $0x30] sm:$0xf]
    %v224 = vld [vmem:[%s5 + $0x34] sm:$0xf]
    %v225 = vld [vmem:[%s5 + $0x38] sm:$0xf]
    %v226 = vld [vmem:[%s5 + $0x3c] sm:$0xf]
    %v227 = vpack.c.bf16 %v209, %v209
    %v228 = vld [vmem:[%s6] sm:$0xf]
    %v229 = vld [vmem:[%s6 + $0x4] sm:$0xf]
    %v230 = vld [vmem:[%s6 + $0x8] sm:$0xf]
    %v231 = vld [vmem:[%s6 + $0xc] sm:$0xf]
    %v232 = vld [vmem:[%s6 + $0x10] sm:$0xf]
    %v233 = vld [vmem:[%s6 + $0x14] sm:$0xf]
    %v234 = vld [vmem:[%s6 + $0x18] sm:$0xf]
    %v235 = vld [vmem:[%s6 + $0x1c] sm:$0xf]
    %v236 = vld [vmem:[%s6 + $0x20] sm:$0xf]
    %v237 = vld [vmem:[%s6 + $0x24] sm:$0xf]
    %v238 = vld [vmem:[%s6 + $0x28] sm:$0xf]
    %v239 = vld [vmem:[%s6 + $0x2c] sm:$0xf]
    %v240 = vld [vmem:[%s6 + $0x30] sm:$0xf]
    %v241 = vld [vmem:[%s6 + $0x34] sm:$0xf]
    %v242 = vld [vmem:[%s6 + $0x38] sm:$0xf]
    %v243 = vld [vmem:[%s6 + $0x3c] sm:$0xf]
    %v260 = vunpack.c.l.b16 %v228
    %v261 = vunpack.c.l.b16 %v229
    %v262 = vunpack.c.l.b16 %v230
    %v263 = vunpack.c.l.b16 %v231
    %v264 = vunpack.c.l.b16 %v232
    %v265 = vunpack.c.l.b16 %v233
    %v266 = vunpack.c.l.b16 %v234
    %v267 = vunpack.c.l.b16 %v235
    %v268 = vunpack.c.l.b16 %v236
    %v269 = vunpack.c.l.b16 %v237
    %v270 = vunpack.c.l.b16 %v238
    %v271 = vunpack.c.l.b16 %v239
    %v272 = vunpack.c.l.b16 %v240
    %v273 = vunpack.c.l.b16 %v241
    %v274 = vunpack.c.l.b16 %v242
    %v275 = vunpack.c.l.b16 %v243
    %v276 = vpack.c.b16 %v261, %v260
    %v277 = vpack.c.b16 %v263, %v262
    %v278 = vpack.c.b16 %v265, %v264
    %v279 = vpack.c.b16 %v267, %v266
    %v280 = vpack.c.b16 %v269, %v268
    %v281 = vpack.c.b16 %v271, %v270
    %v282 = vpack.c.b16 %v273, %v272
    %v283 = vpack.c.b16 %v275, %v274
    %292 = vmatpush.bf16.msra.mxu0 %v283
    %293 = vmatpush.bf16.msra.mxu0 %v282
    %294 = vmatpush.bf16.msra.mxu0 %v281
    %295 = vmatpush.bf16.msra.mxu0 %v280
    %296 = vmatpush.bf16.msra.mxu0 %v279
    %297 = vmatpush.bf16.msra.mxu0 %v278
    %298 = vmatpush.bf16.msra.mxu0 %v277
    %299 = vmatpush.bf16.msra.mxu0 %v276
    %300 = vmatmul.bf16.gmra.mxu0 %v227
    %v301 = vpop.f32.mrf.mxu0
    %v302 = vadd.f32 0.0, %v301
    %v303 = vpop.f32.mrf.mxu0
    %304 = vdwg.mxu0
    %v321 = vunpack.c.l.b16 %v211
    %v322 = vunpack.c.l.b16 %v212
    %v323 = vunpack.c.l.b16 %v213
    %v324 = vunpack.c.l.b16 %v214
    %v325 = vunpack.c.l.b16 %v215
    %v326 = vunpack.c.l.b16 %v216
    %v327 = vunpack.c.l.b16 %v217
    %v328 = vunpack.c.l.b16 %v218
    %v329 = vunpack.c.l.b16 %v219
    %v330 = vunpack.c.l.b16 %v220
    %v331 = vunpack.c.l.b16 %v221
    %v332 = vunpack.c.l.b16 %v222
    %v333 = vunpack.c.l.b16 %v223
    %v334 = vunpack.c.l.b16 %v224
    %v335 = vunpack.c.l.b16 %v225
    %v336 = vunpack.c.l.b16 %v226
    %v337 = vpack.c.b16 %v322, %v321
    %v338 = vpack.c.b16 %v324, %v323
    %v339 = vpack.c.b16 %v326, %v325
    %v340 = vpack.c.b16 %v328, %v327
    %v341 = vpack.c.b16 %v330, %v329
    %v342 = vpack.c.b16 %v332, %v331
    %v343 = vpack.c.b16 %v334, %v333
    %v344 = vpack.c.b16 %v336, %v335
    %353 = vmatpush.bf16.msra.mxu0 %v344
    %354 = vmatpush.bf16.msra.mxu0 %v343
    %355 = vmatpush.bf16.msra.mxu0 %v342
    %356 = vmatpush.bf16.msra.mxu0 %v341
    %357 = vmatpush.bf16.msra.mxu0 %v340
    %358 = vmatpush.bf16.msra.mxu0 %v339
    %359 = vmatpush.bf16.msra.mxu0 %v338
    %360 = vmatpush.bf16.msra.mxu0 %v337
    %361 = vmatmul.bf16.gmra.mxu0 %v210
    %v362 = vpop.f32.mrf.mxu0
    %v363 = vadd.f32 %v302, %v362
    %v364 = vpop.f32.mrf.mxu0
    %365 = vdwg.mxu0
    %v366 = vld [vmem:[%s7] sm:$0x1]
    %v368 = vperm.slane %v366, 0
    %v370 = vadd.f32 %v363, %v368
    %v371 = vmax.f32 %v370, 0.0
    %v372 = vpack.c.bf16 %v371, %v371
    %373 = vst [vmem:[%s8] sm:$0xf] %v372
  $region37: #{model_forward.8} parent=0 // pred_fallthru
    _
  // Predicated region
  $region38: #{model_forward.8} parent=0 // pred_check
    _
  $region39: #{model_forward.8} parent=0 // pred_check_branch
    %375 = sbr.rel (0) target = $region41
  $region40: #{model_forward.8} parent=0 // pred_region
    _
  $region41: #{model_forward.8} parent=0 // pred_fallthru
    _
  // Predicated region
  $region42: #{model_forward.8} parent=0 // pred_check
    _
  $region43: #{model_forward.8} parent=0 // pred_check_branch
    %377 = sbr.rel (0) target = $region45
  $region44: #{model_forward.8} parent=0 // pred_region
    _
  $region45: #{model_forward.8} parent=0 // pred_fallthru
    _

// kernel: model_forward.9
$region0: #{model_forward.9}
  #allocation0 [shape = 'u32[]', space=smem, size = 0x4, offset = 0x4, fixed_abs, tag = 'smem constant byte address 0x4 - core index']
  #allocation1 [shape = 'u32[72,128]{1,0:T(1,128)}', space=vmem, size = 0x9000, scoped, tag = 'internal scratch']
  %s0 = inlined_call_operand.vmem [shape: bf16[16,128], index: 0, kind: input, shape index: {}]
  %s1 = inlined_call_operand.vmem [shape: bf16[16,128], index: 1, kind: input, shape index: {}]
  %s2 = inlined_call_operand.vmem [shape: bf16[128,128], index: 2, kind: input, shape index: {}]
  %s3 = inlined_call_operand.vmem [shape: bf16[128,128], index: 3, kind: input, shape index: {}]
  %s4 = inlined_call_operand.vmem [shape: f32[1,128], index: 4, kind: input, shape index: {}]
  %s5 = inlined_call_operand.hbm [shape: f32[16,128], index: 5, kind: output, shape index: {}]
  %s6 = sld [smem:[#allocation0]]
  $region30: #{model_forward.9} parent=0
    _
  %s8 = ssub.s32 1, %s6
  %s9 = scalar_select 0, %s8, %s6
  $region1: #{model_forward.9} parent=0
    #allocation2 [shape = 'u8[8192]{0}', space=vmem, size = 0x2000, scoped, tag = 'output window, operand 0, single buffered']
    #allocation3 [shape = 's32[1]{0}', space=sflag, size = 0x4, scoped, tag = 'scoped memory for model_forward.9']
    %10 = vsyncpa [#allocation3], 0
    // Predicated region
    $region2: #{model_forward.9} parent=1 // pred_check
      _
    $region3: #{model_forward.9} parent=1 // pred_check_branch
      %12 = sbr.rel (0) target = $region5
    $region4: #{model_forward.9} parent=1 // pred_region
      _
    $region5: #{model_forward.9} parent=1 // pred_fallthru
      _
    // Predicated region
    $region6: #{model_forward.9} parent=1 // pred_check
      _
    $region7: #{model_forward.9} parent=1 // pred_check_branch
      %14 = sbr.rel (0) target = $region9
    $region8: #{model_forward.9} parent=1 // pred_region
      _
    $region9: #{model_forward.9} parent=1 // pred_fallthru
      _
    // Predicated region
    $region10: #{model_forward.9} parent=1 // pred_check
      _
    $region11: #{model_forward.9} parent=1 // pred_check_branch
      %16 = sbr.rel (0) target = $region13
    $region12: #{model_forward.9} parent=1 // pred_region
      _
    $region13: #{model_forward.9} parent=1 // pred_fallthru
      _
    // Predicated region
    $region14: #{model_forward.9} parent=1 // pred_check
      _
    $region15: #{model_forward.9} parent=1 // pred_check_branch
      %18 = sbr.rel (0) target = $region17
    $region16: #{model_forward.9} parent=1 // pred_region
      _
    $region17: #{model_forward.9} parent=1 // pred_fallthru
      _
    // Predicated region
    $region18: #{model_forward.9} parent=1 // pred_check
      _
    $region19: #{model_forward.9} parent=1 // pred_check_branch
      %20 = sbr.rel (0) target = $region21
    $region20: #{model_forward.9} parent=1 // pred_region
      _
    $region21: #{model_forward.9} parent=1 // pred_fallthru
      _
    %v21 = vld [vmem:[%s0] sm:$0xf]
    %v22 = vld [vmem:[%s0 + $0x4] sm:$0xf]
    %v23 = vld [vmem:[%s2] sm:$0xf]
    %v24 = vld [vmem:[%s2 + $0x4] sm:$0xf]
    %v25 = vld [vmem:[%s2 + $0x8] sm:$0xf]
    %v26 = vld [vmem:[%s2 + $0xc] sm:$0xf]
    %v27 = vld [vmem:[%s2 + $0x10] sm:$0xf]
    %v28 = vld [vmem:[%s2 + $0x14] sm:$0xf]
    %v29 = vld [vmem:[%s2 + $0x18] sm:$0xf]
    %v30 = vld [vmem:[%s2 + $0x1c] sm:$0xf]
    %v31 = vld [vmem:[%s2 + $0x20] sm:$0xf]
    %v32 = vld [vmem:[%s2 + $0x24] sm:$0xf]
    %v33 = vld [vmem:[%s2 + $0x28] sm:$0xf]
    %v34 = vld [vmem:[%s2 + $0x2c] sm:$0xf]
    %v35 = vld [vmem:[%s2 + $0x30] sm:$0xf]
    %v36 = vld [vmem:[%s2 + $0x34] sm:$0xf]
    %v37 = vld [vmem:[%s2 + $0x38] sm:$0xf]
    %v38 = vld [vmem:[%s2 + $0x3c] sm:$0xf]
    %v39 = vld [vmem:[%s1] sm:$0xf]
    %v40 = vld [vmem:[%s1 + $0x4] sm:$0xf]
    %v41 = vld [vmem:[%s3] sm:$0xf]
    %v42 = vld [vmem:[%s3 + $0x4] sm:$0xf]
    %v43 = vld [vmem:[%s3 + $0x8] sm:$0xf]
    %v44 = vld [vmem:[%s3 + $0xc] sm:$0xf]
    %v45 = vld [vmem:[%s3 + $0x10] sm:$0xf]
    %v46 = vld [vmem:[%s3 + $0x14] sm:$0xf]
    %v47 = vld [vmem:[%s3 + $0x18] sm:$0xf]
    %v48 = vld [vmem:[%s3 + $0x1c] sm:$0xf]
    %v49 = vld [vmem:[%s3 + $0x20] sm:$0xf]
    %v50 = vld [vmem:[%s3 + $0x24] sm:$0xf]
    %v51 = vld [vmem:[%s3 + $0x28] sm:$0xf]
    %v52 = vld [vmem:[%s3 + $0x2c] sm:$0xf]
    %v53 = vld [vmem:[%s3 + $0x30] sm:$0xf]
    %v54 = vld [vmem:[%s3 + $0x34] sm:$0xf]
    %v55 = vld [vmem:[%s3 + $0x38] sm:$0xf]
    %v56 = vld [vmem:[%s3 + $0x3c] sm:$0xf]
    %v59 = vunpack.c.l.b16 %v39
    %v60 = vunpack.c.l.b16 %v40
    %v61 = vpack.c.b16 %v60, %v59
    %v79 = vunpack.c.l.b16 %v41
    %v80 = vunpack.c.l.b16 %v42
    %v81 = vunpack.c.l.b16 %v43
    %v82 = vunpack.c.l.b16 %v44
    %v83 = vunpack.c.l.b16 %v45
    %v84 = vunpack.c.l.b16 %v46
    %v85 = vunpack.c.l.b16 %v47
    %v86 = vunpack.c.l.b16 %v48
    %v87 = vunpack.c.l.b16 %v49
    %v88 = vunpack.c.l.b16 %v50
    %v89 = vunpack.c.l.b16 %v51
    %v90 = vunpack.c.l.b16 %v52
    %v91 = vunpack.c.l.b16 %v53
    %v92 = vunpack.c.l.b16 %v54
    %v93 = vunpack.c.l.b16 %v55
    %v94 = vunpack.c.l.b16 %v56
    %v95 = vpack.c.b16 %v80, %v79
    %v96 = vpack.c.b16 %v82, %v81
    %v97 = vpack.c.b16 %v84, %v83
    %v98 = vpack.c.b16 %v86, %v85
    %v99 = vpack.c.b16 %v88, %v87
    %v100 = vpack.c.b16 %v90, %v89
    %v101 = vpack.c.b16 %v92, %v91
    %v102 = vpack.c.b16 %v94, %v93
    %111 = vmatpush.bf16.msra.mxu0 %v102
    %112 = vmatpush.bf16.msra.mxu0 %v101
    %113 = vmatpush.bf16.msra.mxu0 %v100
    %114 = vmatpush.bf16.msra.mxu0 %v99
    %115 = vmatpush.bf16.msra.mxu0 %v98
    %116 = vmatpush.bf16.msra.mxu0 %v97
    %117 = vmatpush.bf16.msra.mxu0 %v96
    %118 = vmatpush.bf16.msra.mxu0 %v95
    %119 = vmatmul.bf16.gmra.mxu0 %v61
    %v120 = vpop.f32.mrf.mxu0
    %v121 = vadd.f32 0.0, %v120
    %v122 = vpop.f32.mrf.mxu0
    %v123 = vadd.f32 0.0, %v122
    %124 = vdwg.mxu0
    %v127 = vunpack.c.l.b16 %v21
    %v128 = vunpack.c.l.b16 %v22
    %v129 = vpack.c.b16 %v128, %v127
    %v147 = vunpack.c.l.b16 %v23
    %v148 = vunpack.c.l.b16 %v24
    %v149 = vunpack.c.l.b16 %v25
    %v150 = vunpack.c.l.b16 %v26
    %v151 = vunpack.c.l.b16 %v27
    %v152 = vunpack.c.l.b16 %v28
    %v153 = vunpack.c.l.b16 %v29
    %v154 = vunpack.c.l.b16 %v30
    %v155 = vunpack.c.l.b16 %v31
    %v156 = vunpack.c.l.b16 %v32
    %v157 = vunpack.c.l.b16 %v33
    %v158 = vunpack.c.l.b16 %v34
    %v159 = vunpack.c.l.b16 %v35
    %v160 = vunpack.c.l.b16 %v36
    %v161 = vunpack.c.l.b16 %v37
    %v162 = vunpack.c.l.b16 %v38
    %v163 = vpack.c.b16 %v148, %v147
    %v164 = vpack.c.b16 %v150, %v149
    %v165 = vpack.c.b16 %v152, %v151
    %v166 = vpack.c.b16 %v154, %v153
    %v167 = vpack.c.b16 %v156, %v155
    %v168 = vpack.c.b16 %v158, %v157
    %v169 = vpack.c.b16 %v160, %v159
    %v170 = vpack.c.b16 %v162, %v161
    %179 = vmatpush.bf16.msra.mxu0 %v170
    %180 = vmatpush.bf16.msra.mxu0 %v169
    %181 = vmatpush.bf16.msra.mxu0 %v168
    %182 = vmatpush.bf16.msra.mxu0 %v167
    %183 = vmatpush.bf16.msra.mxu0 %v166
    %184 = vmatpush.bf16.msra.mxu0 %v165
    %185 = vmatpush.bf16.msra.mxu0 %v164
    %186 = vmatpush.bf16.msra.mxu0 %v163
    %187 = vmatmul.bf16.gmra.mxu0 %v129
    %v188 = vpop.f32.mrf.mxu0
    %v189 = vadd.f32 %v121, %v188
    %v190 = vpop.f32.mrf.mxu0
    %v191 = vadd.f32 %v123, %v190
    %192 = vdwg.mxu0
    %v193 = vld [vmem:[%s4] sm:$0x1]
    %v195 = vperm.slane %v193, 0
    %v197 = vadd.f32 %v189, %v195
    %v198 = vadd.f32 %v191, %v195
    %199 = vst [vmem:[#allocation2] sm:$0xff] %v197
    %200 = vst [vmem:[#allocation2 + $0x8] sm:$0xff] %v198
    // Predicated region
    $region22: #{model_forward.9} parent=1 // pred_check
      _
    $region23: #{model_forward.9} parent=1 // pred_check_branch
      %202 = sbr.rel (0) target = $region25
    $region24: #{model_forward.9} parent=1 // pred_region
      %204 = vsyncadd [#allocation3], 0
      %s205 = sshll.u32 [#allocation2], 4
      %s206 = int_to_ptr.vmem [resolvable:$true] %s205
      %s207 = sshll.u32 %s5, 4
      %s208 = int_to_ptr.hbm [resolvable:$true] %s207
      %213 = dma.vmem_to_hbm [thread:$0]  %s206, 256, %s208, [#allocation3], 128, 128, 8
    $region25: #{model_forward.9} parent=1 // pred_fallthru
      _
    // Predicated region
    $region26: #{model_forward.9} parent=1 // pred_check
      _
    $region27: #{model_forward.9} parent=1 // pred_check_branch
      %215 = sbr.rel (0) target = $region29
    $region28: #{model_forward.9} parent=1 // pred_region
      %217 = dma.done [#allocation3], 256
    $region29: #{model_forward.9} parent=1 // pred_fallthru
      _
    %218 = vsyncpa [#allocation3], 1

</llo_original>
